<compile_context>
chip_gen: v7x
topology: tpu7x:2x2x1
jax: 0.10.0
libtpu: 0.0.40
codegen_flags: <defaults>
</compile_context>

<pallas_src>
import functools

import jax
import jax.numpy as jnp
from jax.experimental import pallas as pl
from jax.experimental.pallas import tpu as pltpu

EPS = 0.003
HIDDEN = 64
SUBLANE = 8
TB_MAX = 8192   # rows per batch tile (review: 4096-8192; sweep in production)


def _round_up(x, m):
    return ((x + m - 1) // m) * m


def _actor_kernel(discrete, s_ref, w1_ref, b1_ref, w2_ref, b2_ref,
                  w3_ref, b3_ref, out_ref):
    # Pin matmul precision for the f32 path so the kernel matches the XLA
    # reference bit-for-bit-ish (bf16 operands ignore this).
    prec = jax.lax.Precision.HIGHEST if s_ref.dtype == jnp.float32 else None

    # fc1 + relu  (f32 accumulate; elementwise stays f32 on all chips)
    x = jnp.dot(s_ref[...], w1_ref[...],
                preferred_element_type=jnp.float32, precision=prec)
    x = jnp.maximum(x + b1_ref[...], 0.0)
    # fc2 + relu
    x = jnp.dot(x.astype(w2_ref.dtype), w2_ref[...],
                preferred_element_type=jnp.float32, precision=prec)
    x = jnp.maximum(x + b2_ref[...], 0.0)
    # fc3 + output nonlinearity (tanh only over the narrow action_dim columns)
    x = jnp.dot(x.astype(w3_ref.dtype), w3_ref[...],
                preferred_element_type=jnp.float32, precision=prec)
    x = x + b3_ref[...]
    if not discrete:
        x = jnp.tanh(x)   # EUP slot; action_dim-wide only
    out_ref[...] = x.astype(out_ref.dtype)


def _batch_tiling(n):
    """Pick the batch tile.

    * >= 2 grid steps whenever the batch allows (so the 'parallel' batch axis
      can shard across both v7x TensorCores).
    * tile rows a multiple of 8 sublanes, capped at TB_MAX.
    * tb derived from cdiv(n, tiles) so the padded tail is at most 7 rows.
    """
    tiles = max(pl.cdiv(n, TB_MAX), 2 if n >= 2 * SUBLANE else 1)
    tb = min(_round_up(pl.cdiv(n, tiles), SUBLANE), TB_MAX)
    n_p = _round_up(n, tb)
    return tb, n_p


def mlp_actor_forward(state, params, *, discrete, compute_dtype=jnp.float32):
    """state: [N, state_dim] f32.  params: [in, out] weights + (1, out) biases (f32).

    compute_dtype controls the matmul-operand dtype (bf16 recommended on
    v6e/v7x); accumulation, bias/relu/tanh and the stored output stay f32.
    """
    n, state_dim = state.shape
    action_dim = params["w3"].shape[1]
    itemsize = jnp.dtype(compute_dtype).itemsize

    # Matmul operands in compute_dtype; biases stay f32 (elementwise path).
    # NOTE: in a real pipeline the upstream producer should emit bf16 directly
    # so this cast is not a separate HBM pass.
    s = state.astype(compute_dtype)
    w1 = params["w1"].astype(compute_dtype)
    w2 = params["w2"].astype(compute_dtype)
    w3 = params["w3"].astype(compute_dtype)
    b1, b2, b3 = params["b1"], params["b2"], params["b3"]

    tb, n_p = _batch_tiling(n)
    if n_p != n:   # at most 7 padded rows (zeros -> finite through tanh)
        s = jnp.pad(s, ((0, n_p - n), (0, 0)))
    grid = (n_p // tb,)

    # weights/biases: constant block index -> DMA'd once, resident in VMEM.
    resident = lambda a: pl.BlockSpec(a.shape, lambda i: (0, 0))

    flops = 2 * n_p * (state_dim * HIDDEN + HIDDEN * HIDDEN + HIDDEN * action_dim)
    transcendentals = 0 if discrete else n_p * action_dim
    bytes_accessed = (n_p * state_dim * itemsize            # state read
                      + n_p * action_dim * 4                 # narrow output write
                      + (state_dim * HIDDEN + HIDDEN * HIDDEN
                         + HIDDEN * action_dim) * itemsize   # weights
                      + 4 * (2 * HIDDEN + action_dim))       # biases

    out = pl.pallas_call(
        functools.partial(_actor_kernel, discrete),
        out_shape=jax.ShapeDtypeStruct((n_p, action_dim), jnp.float32),
        grid_spec=pltpu.PrefetchScalarGridSpec(
            num_scalar_prefetch=0,
            grid=grid,
            in_specs=[
                pl.BlockSpec((tb, state_dim), lambda i: (i, 0)),   # streamed input
                resident(w1), resident(b1),
                resident(w2), resident(b2),
                resident(w3), resident(b3),
            ],
            # last dim == full array dim (action_dim), so a narrow block is legal;
            # masked vst cost << the 32x HBM-writeback savings.
            out_specs=pl.BlockSpec((tb, action_dim), lambda i: (i, 0)),
        ),
        compiler_params=pltpu.CompilerParams(
            dimension_semantics=("parallel",),   # batch axis shards across TCs (v7x)
        ),
        cost_estimate=pl.CostEstimate(
            flops=flops,
            transcendentals=transcendentals,
            bytes_accessed=bytes_accessed,
        ),
    )(s, w1, b1, w2, b2, w3, b3)

    return out[:n]


def init_params(key, state_dim, action_dim, discrete):
    """Mirrors nn.Linear defaults; for the continuous actor the ORIGINAL module
    re-initializes fc2's weight with uniform(-EPS, EPS) (per the PyTorch spec)."""
    ks = jax.random.split(key, 7)

    def linear(kw, kb, fan_in, fan_out):
        bound = 1.0 / (fan_in ** 0.5)
        # stored as [in, out] (transposed vs. PyTorch's [out, in])
        w = jax.random.uniform(kw, (fan_in, fan_out), jnp.float32, -bound, bound)
        b = jax.random.uniform(kb, (1, fan_out), jnp.float32, -bound, bound)
        return w, b

    w1, b1 = linear(ks[0], ks[1], state_dim, HIDDEN)
    w2, b2 = linear(ks[2], ks[3], HIDDEN, HIDDEN)
    w3, b3 = linear(ks[4], ks[5], HIDDEN, action_dim)
    if not discrete:
        # PyTorch spec: self.fc2.weight.data.uniform_(-EPS, EPS)  (fc2, bias untouched)
        w2 = jax.random.uniform(ks[6], (HIDDEN, HIDDEN), jnp.float32, -EPS, EPS)
    return {"w1": w1, "b1": b1, "w2": w2, "b2": b2, "w3": w3, "b3": b3}


def reference_forward(state, params, *, discrete):
    prec = jax.lax.Precision.HIGHEST
    x = jnp.maximum(jnp.dot(state, params["w1"], precision=prec) + params["b1"], 0.0)
    x = jnp.maximum(jnp.dot(x, params["w2"], precision=prec) + params["b2"], 0.0)
    x = jnp.dot(x, params["w3"], precision=prec) + params["b3"]
    return x if discrete else jnp.tanh(x)


if __name__ == "__main__":
    key = jax.random.PRNGKey(0)
    k_state, k_param, k_state2 = jax.random.split(key, 3)

    batch, state_dim, action_dim = 8, 16, 4

    # --- continuous (tanh) actor, f32 compute -------------------------------
    state = jax.random.normal(k_state, (batch, state_dim), jnp.float32)
    params = init_params(k_param, state_dim, action_dim, discrete=False)

    out = jax.block_until_ready(mlp_actor_forward(state, params, discrete=False))
    ref = reference_forward(state, params, discrete=False)
    assert out.shape == (batch, action_dim)
    assert jnp.allclose(out, ref, atol=1e-5, rtol=1e-5)

    # larger batch: exercises >=2 grid steps and the padded-tail path
    state2 = jax.random.normal(k_state2, (40, state_dim), jnp.float32)
    out2 = jax.block_until_ready(mlp_actor_forward(state2, params, discrete=False))
    ref2 = reference_forward(state2, params, discrete=False)
    assert out2.shape == (40, action_dim)
    assert jnp.allclose(out2, ref2, atol=1e-5, rtol=1e-5)

    # bf16 matmul-operand path (v6e/v7x MXU-native); f32 accumulate/elementwise
    out_bf = jax.block_until_ready(
        mlp_actor_forward(state2, params, discrete=False, compute_dtype=jnp.bfloat16))
    assert jnp.allclose(out_bf, ref2, atol=5e-2, rtol=5e-2)

    # --- discrete (identity output) actor ------------------------------------
    params_d = init_params(k_param, state_dim, action_dim, discrete=True)
    out_d = jax.block_until_ready(mlp_actor_forward(state, params_d, discrete=True))
    ref_d = reference_forward(state, params_d, discrete=True)
    assert jnp.allclose(out_d, ref_d, atol=1e-5, rtol=1e-5)

    print("KERNEL_OK")
</pallas_src>

<mosaic_0001>
module attributes {stable_mosaic.version = 11 : i64} {
  func.func @_actor_kernel(%arg0: i32, %arg1: memref<8x16xf32, #tpu.memory_space<vmem>>, %arg2: memref<16x64xf32, #tpu.memory_space<vmem>>, %arg3: memref<1x64xf32, #tpu.memory_space<vmem>>, %arg4: memref<64x64xf32, #tpu.memory_space<vmem>>, %arg5: memref<1x64xf32, #tpu.memory_space<vmem>>, %arg6: memref<64x4xf32, #tpu.memory_space<vmem>>, %arg7: memref<1x4xf32, #tpu.memory_space<vmem>>, %arg8: memref<8x4xf32, #tpu.memory_space<vmem>>) attributes {dimension_semantics = [#tpu.dimension_semantics<parallel>], iteration_bounds = array<i64: 1>, scalar_prefetch = 0 : i64, scratch_operands = 0 : i64, tpu.core_type = #tpu.core_type<tc>, window_params = [{transform_indices = @transform_0, window_bounds = array<i64: 8, 16>}, {pipeline_mode = #tpu.pipeline_mode<synchronous>, transform_indices = @transform_1, window_bounds = array<i64: 16, 64>}, {pipeline_mode = #tpu.pipeline_mode<synchronous>, transform_indices = @transform_2, window_bounds = array<i64: 1, 64>}, {pipeline_mode = #tpu.pipeline_mode<synchronous>, transform_indices = @transform_3, window_bounds = array<i64: 64, 64>}, {pipeline_mode = #tpu.pipeline_mode<synchronous>, transform_indices = @transform_4, window_bounds = array<i64: 1, 64>}, {pipeline_mode = #tpu.pipeline_mode<synchronous>, transform_indices = @transform_5, window_bounds = array<i64: 64, 4>}, {pipeline_mode = #tpu.pipeline_mode<synchronous>, transform_indices = @transform_6, window_bounds = array<i64: 1, 4>}, {transform_indices = @transform_7, window_bounds = array<i64: 8, 4>}]} {
    %c0 = arith.constant 0 : index
    %c0_0 = arith.constant 0 : index
    %0 = vector.load %arg1[%c0, %c0_0] : memref<8x16xf32, #tpu.memory_space<vmem>>, vector<8x16xf32>
    %c0_1 = arith.constant 0 : index
    %c0_2 = arith.constant 0 : index
    %1 = vector.load %arg2[%c0_1, %c0_2] : memref<16x64xf32, #tpu.memory_space<vmem>>, vector<16x64xf32>
    %cst = arith.constant dense<0.000000e+00> : vector<8x64xf32>
    %2 = tpu.matmul %0, %1, %cst {dimension_numbers = #tpu.dot_dimension_numbers<[1], [0], [0], [1], [0, 0, 1, 1], [], []>, precision = #tpu.contract_precision<fp32>} : vector<8x16xf32>, vector<16x64xf32>, vector<8x64xf32> -> vector<8x64xf32>
    %c0_3 = arith.constant 0 : index
    %c0_4 = arith.constant 0 : index
    %3 = vector.load %arg3[%c0_3, %c0_4] : memref<1x64xf32, #tpu.memory_space<vmem>>, vector<1x64xf32>
    %4 = vector.broadcast %3 : vector<1x64xf32> to vector<8x64xf32>
    %5 = arith.addf %2, %4 : vector<8x64xf32>
    %cst_5 = arith.constant 0.000000e+00 : f32
    %6 = vector.broadcast %cst_5 : f32 to vector<8x64xf32>
    %7 = arith.maximumf %5, %6 : vector<8x64xf32>
    %c0_6 = arith.constant 0 : index
    %c0_7 = arith.constant 0 : index
    %8 = vector.load %arg4[%c0_6, %c0_7] : memref<64x64xf32, #tpu.memory_space<vmem>>, vector<64x64xf32>
    %cst_8 = arith.constant dense<0.000000e+00> : vector<8x64xf32>
    %9 = tpu.matmul %7, %8, %cst_8 {dimension_numbers = #tpu.dot_dimension_numbers<[1], [0], [0], [1], [0, 0, 1, 1], [], []>, precision = #tpu.contract_precision<fp32>} : vector<8x64xf32>, vector<64x64xf32>, vector<8x64xf32> -> vector<8x64xf32>
    %c0_9 = arith.constant 0 : index
    %c0_10 = arith.constant 0 : index
    %10 = vector.load %arg5[%c0_9, %c0_10] : memref<1x64xf32, #tpu.memory_space<vmem>>, vector<1x64xf32>
    %11 = vector.broadcast %10 : vector<1x64xf32> to vector<8x64xf32>
    %12 = arith.addf %9, %11 : vector<8x64xf32>
    %cst_11 = arith.constant 0.000000e+00 : f32
    %13 = vector.broadcast %cst_11 : f32 to vector<8x64xf32>
    %14 = arith.maximumf %12, %13 : vector<8x64xf32>
    %c0_12 = arith.constant 0 : index
    %c0_13 = arith.constant 0 : index
    %15 = vector.load %arg6[%c0_12, %c0_13] : memref<64x4xf32, #tpu.memory_space<vmem>>, vector<64x4xf32>
    %cst_14 = arith.constant dense<0.000000e+00> : vector<8x4xf32>
    %16 = tpu.matmul %14, %15, %cst_14 {dimension_numbers = #tpu.dot_dimension_numbers<[1], [0], [0], [1], [0, 0, 1, 1], [], []>, precision = #tpu.contract_precision<fp32>} : vector<8x64xf32>, vector<64x4xf32>, vector<8x4xf32> -> vector<8x4xf32>
    %c0_15 = arith.constant 0 : index
    %c0_16 = arith.constant 0 : index
    %17 = vector.load %arg7[%c0_15, %c0_16] : memref<1x4xf32, #tpu.memory_space<vmem>>, vector<1x4xf32>
    %18 = vector.broadcast %17 : vector<1x4xf32> to vector<8x4xf32>
    %19 = arith.addf %16, %18 : vector<8x4xf32>
    %20 = math.tanh %19 : vector<8x4xf32>
    %c0_17 = arith.constant 0 : index
    %c0_18 = arith.constant 0 : index
    %21 = vector.load %arg8[%c0_17, %c0_18] : memref<8x4xf32, #tpu.memory_space<vmem>>, vector<8x4xf32>
    tpu.vector_store %arg8[%c0_17, %c0_18], %20 {strides = array<i32>} : memref<8x4xf32, #tpu.memory_space<vmem>>, vector<8x4xf32>,
    return
  }
  func.func @transform_0(%arg0: i32) -> (i32, i32) {
    %c0_i32 = arith.constant 0 : i32
    %c0_i32_0 = arith.constant 0 : i32
    return %arg0, %c0_i32 : i32, i32
  }
  func.func @transform_1(%arg0: i32) -> (i32, i32) {
    %c0_i32 = arith.constant 0 : i32
    %c0_i32_0 = arith.constant 0 : i32
    %c0_i32_1 = arith.constant 0 : i32
    return %c0_i32, %c0_i32_0 : i32, i32
  }
  func.func @transform_2(%arg0: i32) -> (i32, i32) {
    %c0_i32 = arith.constant 0 : i32
    %c0_i32_0 = arith.constant 0 : i32
    %c0_i32_1 = arith.constant 0 : i32
    return %c0_i32, %c0_i32_0 : i32, i32
  }
  func.func @transform_3(%arg0: i32) -> (i32, i32) {
    %c0_i32 = arith.constant 0 : i32
    %c0_i32_0 = arith.constant 0 : i32
    %c0_i32_1 = arith.constant 0 : i32
    return %c0_i32, %c0_i32_0 : i32, i32
  }
  func.func @transform_4(%arg0: i32) -> (i32, i32) {
    %c0_i32 = arith.constant 0 : i32
    %c0_i32_0 = arith.constant 0 : i32
    %c0_i32_1 = arith.constant 0 : i32
    return %c0_i32, %c0_i32_0 : i32, i32
  }
  func.func @transform_5(%arg0: i32) -> (i32, i32) {
    %c0_i32 = arith.constant 0 : i32
    %c0_i32_0 = arith.constant 0 : i32
    %c0_i32_1 = arith.constant 0 : i32
    return %c0_i32, %c0_i32_0 : i32, i32
  }
  func.func @transform_6(%arg0: i32) -> (i32, i32) {
    %c0_i32 = arith.constant 0 : i32
    %c0_i32_0 = arith.constant 0 : i32
    %c0_i32_1 = arith.constant 0 : i32
    return %c0_i32, %c0_i32_0 : i32, i32
  }
  func.func @transform_7(%arg0: i32) -> (i32, i32) {
    %c0_i32 = arith.constant 0 : i32
    %c0_i32_0 = arith.constant 0 : i32
    return %arg0, %c0_i32 : i32, i32
  }
}

</mosaic_0001>

<llo_original>
// kernel: tpu_custom_call.1
$region0: #{tpu_custom_call.1}
  #allocation0 [shape = 'u32[]', space=smem, size = 0x4, offset = 0x4, fixed_abs, tag = 'smem constant byte address 0x4 - core index']
  #allocation1 [shape = 'u32[144,128]{1,0:T(1,128)}', space=vmem, size = 0x12000, scoped, tag = 'internal scratch']
  %s0 = inlined_call_operand.vmem [shape: f32[8,16], index: 0, kind: input, shape index: {}]
  %s1 = inlined_call_operand.hbm [shape: f32[16,64], index: 1, kind: input, shape index: {}]
  %s2 = inlined_call_operand.vmem [shape: f32[1,64], index: 2, kind: input, shape index: {}]
  %s3 = inlined_call_operand.vmem [shape: f32[64,64], index: 3, kind: input, shape index: {}]
  %s4 = inlined_call_operand.vmem [shape: f32[1,64], index: 4, kind: input, shape index: {}]
  %s5 = inlined_call_operand.vmem [shape: f32[64,4], index: 5, kind: input, shape index: {}]
  %s6 = inlined_call_operand.vmem [shape: f32[1,4], index: 6, kind: input, shape index: {}]
  %s7 = inlined_call_operand.vmem [shape: f32[8,4], index: 7, kind: output, shape index: {}]
  %s8 = sld [smem:[#allocation0]]
  $region42: #{tpu_custom_call.1} parent=0
    _
  %s10 = ssub.s32 1, %s8
  %s11 = scalar_select 0, %s10, %s8
  $region1: #{tpu_custom_call.1} parent=0
    #allocation2 [shape = 'u8[8192]{0}', space=vmem, size = 0x2000, scoped, tag = 'input window, operand 1, single buffered']
    #allocation3 [shape = 's32[1]{0}', space=sflag, size = 0x4, scoped, tag = 'scoped memory for tpu_custom_call.1']
    %12 = vsyncpa [#allocation3], 0
    // Predicated region
    $region2: #{tpu_custom_call.1} parent=1 // pred_check
      _
    $region3: #{tpu_custom_call.1} parent=1 // pred_check_branch
      %14 = sbr.rel (0) target = $region5
    $region4: #{tpu_custom_call.1} parent=1 // pred_region
      _
    $region5: #{tpu_custom_call.1} parent=1 // pred_fallthru
      _
    // Predicated region
    $region6: #{tpu_custom_call.1} parent=1 // pred_check
      _
    $region7: #{tpu_custom_call.1} parent=1 // pred_check_branch
      %16 = sbr.rel (0) target = $region9
    $region8: #{tpu_custom_call.1} parent=1 // pred_region
      %s18 = ssub.s32 256, 256
      %19 = vsyncadd [#allocation3], %s18
      %s20 = sshll.u32 [#allocation2], 4
      %s21 = int_to_ptr.vmem [resolvable:$true] %s20
      %26 = dma.hbm_to_vmem [thread:$0]  %s1, 256, %s21, [#allocation3], 128, 128, 8
    $region9: #{tpu_custom_call.1} parent=1 // pred_fallthru
      _
    // Predicated region
    $region10: #{tpu_custom_call.1} parent=1 // pred_check
      _
    $region11: #{tpu_custom_call.1} parent=1 // pred_check_branch
      %28 = sbr.rel (0) target = $region13
    $region12: #{tpu_custom_call.1} parent=1 // pred_region
      _
    $region13: #{tpu_custom_call.1} parent=1 // pred_fallthru
      _
    // Predicated region
    $region14: #{tpu_custom_call.1} parent=1 // pred_check
      _
    $region15: #{tpu_custom_call.1} parent=1 // pred_check_branch
      %30 = sbr.rel (0) target = $region17
    $region16: #{tpu_custom_call.1} parent=1 // pred_region
      _
    $region17: #{tpu_custom_call.1} parent=1 // pred_fallthru
      _
    // Predicated region
    $region18: #{tpu_custom_call.1} parent=1 // pred_check
      _
    $region19: #{tpu_custom_call.1} parent=1 // pred_check_branch
      %32 = sbr.rel (0) target = $region21
    $region20: #{tpu_custom_call.1} parent=1 // pred_region
      _
    $region21: #{tpu_custom_call.1} parent=1 // pred_fallthru
      _
    // Predicated region
    $region22: #{tpu_custom_call.1} parent=1 // pred_check
      _
    $region23: #{tpu_custom_call.1} parent=1 // pred_check_branch
      %34 = sbr.rel (0) target = $region25
    $region24: #{tpu_custom_call.1} parent=1 // pred_region
      _
    $region25: #{tpu_custom_call.1} parent=1 // pred_fallthru
      _
    // Predicated region
    $region26: #{tpu_custom_call.1} parent=1 // pred_check
      _
    $region27: #{tpu_custom_call.1} parent=1 // pred_check_branch
      %36 = sbr.rel (0) target = $region29
    $region28: #{tpu_custom_call.1} parent=1 // pred_region
      _
    $region29: #{tpu_custom_call.1} parent=1 // pred_fallthru
      _
    // Predicated region
    $region30: #{tpu_custom_call.1} parent=1 // pred_check
      _
    $region31: #{tpu_custom_call.1} parent=1 // pred_check_branch
      %38 = sbr.rel (0) target = $region33
    $region32: #{tpu_custom_call.1} parent=1 // pred_region
      %39 = dma.done [#allocation3], 256
    $region33: #{tpu_custom_call.1} parent=1 // pred_fallthru
      _
    %v40 = vld [vmem:[%s0] sm:$0xff]
    %v41 = vld [vmem:[#allocation2] sm:$0xff]
    %v42 = vld [vmem:[#allocation2 + $0x8] sm:$0xff]
    %v43 = vld [vmem:[%s2] sm:$0x1]
    %v45 = vlaneseq
    %v46 = vshrl.u32 %v45, 7
    %v47 = vsub.s32 0, %v46
    %v48 = vrot.slane %v43, %v47
    %vm50 = vcmask 130048
    %v52 = vsel %vm50, %v40, 0
    %54 = vmatprep.subr.mxu0 0.0
    %v55 = vand.u32 %v41, 4294901760
    %56 = vmatpush1.msra.mxu0 %v55
    %57 = vmatprep.subr.mxu0 0.0
    %v58 = vand.u32 %v42, 4294901760
    %59 = vmatpush1.msra.mxu0 %v58
    %60 = vmatprep.subr.mxu0 0.0
    %61 = vmatpush1.msra.mxu0 0.0
    %62 = vmatprep.subr.mxu0 0.0
    %63 = vmatpush1.msra.mxu0 0.0
    %64 = vmatprep.subr.mxu0 0.0
    %65 = vmatpush1.msra.mxu0 0.0
    %66 = vmatprep.subr.mxu0 0.0
    %67 = vmatpush1.msra.mxu0 0.0
    %68 = vmatprep.subr.mxu0 0.0
    %69 = vmatpush1.msra.mxu0 0.0
    %70 = vmatprep.subr.mxu0 0.0
    %71 = vmatpush1.msra.mxu0 0.0
    %72 = vmatprep.subr.mxu0 0.0
    %73 = vmatpush1.msra.mxu0 0.0
    %74 = vmatprep.subr.mxu0 0.0
    %75 = vmatpush1.msra.mxu0 0.0
    %76 = vmatprep.subr.mxu0 0.0
    %77 = vmatpush1.msra.mxu0 0.0
    %78 = vmatprep.subr.mxu0 0.0
    %79 = vmatpush1.msra.mxu0 0.0
    %80 = vmatprep.subr.mxu0 0.0
    %81 = vmatpush1.msra.mxu0 0.0
    %82 = vmatprep.subr.mxu0 0.0
    %83 = vmatpush1.msra.mxu0 0.0
    %84 = vmatprep.subr.mxu0 0.0
    %85 = vmatpush1.msra.mxu0 0.0
    %86 = vmatprep.subr.mxu0 0.0
    %87 = vmatpush1.msra.mxu0 0.0
    %88 = vmatprep.subr.mxu0 0.0
    %89 = vmatpush1.msra.mxu0 0.0
    %90 = vmatprep.subr.mxu0 0.0
    %91 = vmatpush1.msra.mxu0 0.0
    %92 = vmatprep.subr.mxu0 0.0
    %93 = vmatpush1.msra.mxu0 0.0
    %94 = vmatprep.subr.mxu0 0.0
    %95 = vmatpush1.msra.mxu0 0.0
    %96 = vmatprep.subr.mxu0 0.0
    %97 = vmatpush1.msra.mxu0 0.0
    %98 = vmatprep.subr.mxu0 0.0
    %99 = vmatpush1.msra.mxu0 0.0
    %100 = vmatprep.subr.mxu0 0.0
    %101 = vmatpush1.msra.mxu0 0.0
    %102 = vmatprep.subr.mxu0 0.0
    %103 = vmatpush1.msra.mxu0 0.0
    %104 = vmatprep.subr.mxu0 0.0
    %105 = vmatpush1.msra.mxu0 0.0
    %106 = vmatprep.subr.mxu0 0.0
    %107 = vmatpush1.msra.mxu0 0.0
    %108 = vmatprep.subr.mxu0 0.0
    %109 = vmatpush1.msra.mxu0 0.0
    %110 = vmatprep.subr.mxu0 0.0
    %111 = vmatpush1.msra.mxu0 0.0
    %112 = vmatprep.subr.mxu0 0.0
    %113 = vmatpush1.msra.mxu0 0.0
    %114 = vmatprep.subr.mxu0 0.0
    %115 = vmatpush1.msra.mxu0 0.0
    %116 = vmatprep.subr.mxu0 0.0
    %117 = vmatpush1.msra.mxu0 0.0
    %118 = vmatprep.subr.mxu0 0.0
    %119 = vmatpush1.msra.mxu0 0.0
    %120 = vmatprep.mubr.f32.mxu0 0.0
    %v121 = vand.u32 %v52, 4294901760
    %v122 = vsub.f32 %v52, %v121
    %v123 = vand.u32 %v122, 4294901760
    %v124 = vsub.f32 %v122, %v123
    %v125 = vand.u32 %v124, 4294901760
    %126 = vmatmul.mubr.f32.gmra.mrb[0].mxu0 %v125
    %v127 = vpop.f32.mrb[0].mxu0
    %v128 = vadd.f32 %v48, %v127
    %v129 = vpop.f32.mrb[0].mxu0
    %130 = vdwg.mxu0
    %131 = vmatprep.subr.mxu0 0.0
    %v132 = vand.u32 %v41, 4294901760
    %v133 = vsub.f32 %v41, %v132
    %v134 = vand.u32 %v133, 4294901760
    %v135 = vsub.f32 %v133, %v134
    %v136 = vand.u32 %v135, 4294901760
    %137 = vmatpush1.msra.mxu0 %v136
    %138 = vmatprep.subr.mxu0 0.0
    %v139 = vand.u32 %v42, 4294901760
    %v140 = vsub.f32 %v42, %v139
    %v141 = vand.u32 %v140, 4294901760
    %v142 = vsub.f32 %v140, %v141
    %v143 = vand.u32 %v142, 4294901760
    %144 = vmatpush1.msra.mxu0 %v143
    %145 = vmatprep.subr.mxu0 0.0
    %146 = vmatpush1.msra.mxu0 0.0
    %147 = vmatprep.subr.mxu0 0.0
    %148 = vmatpush1.msra.mxu0 0.0
    %149 = vmatprep.subr.mxu0 0.0
    %150 = vmatpush1.msra.mxu0 0.0
    %151 = vmatprep.subr.mxu0 0.0
    %152 = vmatpush1.msra.mxu0 0.0
    %153 = vmatprep.subr.mxu0 0.0
    %154 = vmatpush1.msra.mxu0 0.0
    %155 = vmatprep.subr.mxu0 0.0
    %156 = vmatpush1.msra.mxu0 0.0
    %157 = vmatprep.subr.mxu0 0.0
    %158 = vmatpush1.msra.mxu0 0.0
    %159 = vmatprep.subr.mxu0 0.0
    %160 = vmatpush1.msra.mxu0 0.0
    %161 = vmatprep.subr.mxu0 0.0
    %162 = vmatpush1.msra.mxu0 0.0
    %163 = vmatprep.subr.mxu0 0.0
    %164 = vmatpush1.msra.mxu0 0.0
    %165 = vmatprep.subr.mxu0 0.0
    %166 = vmatpush1.msra.mxu0 0.0
    %167 = vmatprep.subr.mxu0 0.0
    %168 = vmatpush1.msra.mxu0 0.0
    %169 = vmatprep.subr.mxu0 0.0
    %170 = vmatpush1.msra.mxu0 0.0
    %171 = vmatprep.subr.mxu0 0.0
    %172 = vmatpush1.msra.mxu0 0.0
    %173 = vmatprep.subr.mxu0 0.0
    %174 = vmatpush1.msra.mxu0 0.0
    %175 = vmatprep.subr.mxu0 0.0
    %176 = vmatpush1.msra.mxu0 0.0
    %177 = vmatprep.subr.mxu0 0.0
    %178 = vmatpush1.msra.mxu0 0.0
    %179 = vmatprep.subr.mxu0 0.0
    %180 = vmatpush1.msra.mxu0 0.0
    %181 = vmatprep.subr.mxu0 0.0
    %182 = vmatpush1.msra.mxu0 0.0
    %183 = vmatprep.subr.mxu0 0.0
    %184 = vmatpush1.msra.mxu0 0.0
    %185 = vmatprep.subr.mxu0 0.0
    %186 = vmatpush1.msra.mxu0 0.0
    %187 = vmatprep.subr.mxu0 0.0
    %188 = vmatpush1.msra.mxu0 0.0
    %189 = vmatprep.subr.mxu0 0.0
    %190 = vmatpush1.msra.mxu0 0.0
    %191 = vmatprep.subr.mxu0 0.0
    %192 = vmatpush1.msra.mxu0 0.0
    %193 = vmatprep.subr.mxu0 0.0
    %194 = vmatpush1.msra.mxu0 0.0
    %195 = vmatprep.subr.mxu0 0.0
    %196 = vmatpush1.msra.mxu0 0.0
    %197 = vmatprep.subr.mxu0 0.0
    %198 = vmatpush1.msra.mxu0 0.0
    %199 = vmatprep.subr.mxu0 0.0
    %200 = vmatpush1.msra.mxu0 0.0
    %201 = vmatprep.subr.mxu0 0.0
    %202 = vmatpush1.msra.mxu0 0.0
    %203 = vmatprep.subr.mxu0 0.0
    %204 = vmatpush1.msra.mxu0 0.0
    %205 = vmatprep.mubr.f32.mxu0 0.0
    %v206 = vand.u32 %v52, 4294901760
    %207 = vmatmul.mubr.f32.gmra.mrb[0].mxu0 %v206
    %v208 = vpop.f32.mrb[0].mxu0
    %v209 = vadd.f32 %v128, %v208
    %v210 = vpop.f32.mrb[0].mxu0
    %211 = vdwg.mxu0
    %212 = vmatprep.subr.mxu0 0.0
    %v213 = vand.u32 %v41, 4294901760
    %v214 = vsub.f32 %v41, %v213
    %215 = vmatpush1.msra.mxu0 %v214
    %216 = vmatprep.subr.mxu0 0.0
    %v217 = vand.u32 %v42, 4294901760
    %v218 = vsub.f32 %v42, %v217
    %219 = vmatpush1.msra.mxu0 %v218
    %220 = vmatprep.subr.mxu0 0.0
    %221 = vmatpush1.msra.mxu0 0.0
    %222 = vmatprep.subr.mxu0 0.0
    %223 = vmatpush1.msra.mxu0 0.0
    %224 = vmatprep.subr.mxu0 0.0
    %225 = vmatpush1.msra.mxu0 0.0
    %226 = vmatprep.subr.mxu0 0.0
    %227 = vmatpush1.msra.mxu0 0.0
    %228 = vmatprep.subr.mxu0 0.0
    %229 = vmatpush1.msra.mxu0 0.0
    %230 = vmatprep.subr.mxu0 0.0
    %231 = vmatpush1.msra.mxu0 0.0
    %232 = vmatprep.subr.mxu0 0.0
    %233 = vmatpush1.msra.mxu0 0.0
    %234 = vmatprep.subr.mxu0 0.0
    %235 = vmatpush1.msra.mxu0 0.0
    %236 = vmatprep.subr.mxu0 0.0
    %237 = vmatpush1.msra.mxu0 0.0
    %238 = vmatprep.subr.mxu0 0.0
    %239 = vmatpush1.msra.mxu0 0.0
    %240 = vmatprep.subr.mxu0 0.0
    %241 = vmatpush1.msra.mxu0 0.0
    %242 = vmatprep.subr.mxu0 0.0
    %243 = vmatpush1.msra.mxu0 0.0
    %244 = vmatprep.subr.mxu0 0.0
    %245 = vmatpush1.msra.mxu0 0.0
    %246 = vmatprep.subr.mxu0 0.0
    %247 = vmatpush1.msra.mxu0 0.0
    %248 = vmatprep.subr.mxu0 0.0
    %249 = vmatpush1.msra.mxu0 0.0
    %250 = vmatprep.subr.mxu0 0.0
    %251 = vmatpush1.msra.mxu0 0.0
    %252 = vmatprep.subr.mxu0 0.0
    %253 = vmatpush1.msra.mxu0 0.0
    %254 = vmatprep.subr.mxu0 0.0
    %255 = vmatpush1.msra.mxu0 0.0
    %256 = vmatprep.subr.mxu0 0.0
    %257 = vmatpush1.msra.mxu0 0.0
    %258 = vmatprep.subr.mxu0 0.0
    %259 = vmatpush1.msra.mxu0 0.0
    %260 = vmatprep.subr.mxu0 0.0
    %261 = vmatpush1.msra.mxu0 0.0
    %262 = vmatprep.subr.mxu0 0.0
    %263 = vmatpush1.msra.mxu0 0.0
    %264 = vmatprep.subr.mxu0 0.0
    %265 = vmatpush1.msra.mxu0 0.0
    %266 = vmatprep.subr.mxu0 0.0
    %267 = vmatpush1.msra.mxu0 0.0
    %268 = vmatprep.subr.mxu0 0.0
    %269 = vmatpush1.msra.mxu0 0.0
    %270 = vmatprep.subr.mxu0 0.0
    %271 = vmatpush1.msra.mxu0 0.0
    %272 = vmatprep.subr.mxu0 0.0
    %273 = vmatpush1.msra.mxu0 0.0
    %274 = vmatprep.subr.mxu0 0.0
    %275 = vmatpush1.msra.mxu0 0.0
    %276 = vmatprep.subr.mxu0 0.0
    %277 = vmatpush1.msra.mxu0 0.0
    %278 = vmatprep.subr.mxu0 0.0
    %279 = vmatpush1.msra.mxu0 0.0
    %280 = vmatprep.mubr.f32.mxu0 0.0
    %v281 = vand.u32 %v52, 4294901760
    %v282 = vsub.f32 %v52, %v281
    %283 = vmatmul.mubr.f32.gmra.mrb[0].mxu0 %v282
    %v284 = vpop.f32.mrb[0].mxu0
    %v285 = vadd.f32 %v209, %v284
    %v286 = vpop.f32.mrb[0].mxu0
    %287 = vdwg.mxu0
    %288 = vmatprep.subr.mxu0 0.0
    %v289 = vand.u32 %v41, 4294901760
    %290 = vmatpush1.msra.mxu0 %v289
    %291 = vmatprep.subr.mxu0 0.0
    %v292 = vand.u32 %v42, 4294901760
    %293 = vmatpush1.msra.mxu0 %v292
    %294 = vmatprep.subr.mxu0 0.0
    %295 = vmatpush1.msra.mxu0 0.0
    %296 = vmatprep.subr.mxu0 0.0
    %297 = vmatpush1.msra.mxu0 0.0
    %298 = vmatprep.subr.mxu0 0.0
    %299 = vmatpush1.msra.mxu0 0.0
    %300 = vmatprep.subr.mxu0 0.0
    %301 = vmatpush1.msra.mxu0 0.0
    %302 = vmatprep.subr.mxu0 0.0
    %303 = vmatpush1.msra.mxu0 0.0
    %304 = vmatprep.subr.mxu0 0.0
    %305 = vmatpush1.msra.mxu0 0.0
    %306 = vmatprep.subr.mxu0 0.0
    %307 = vmatpush1.msra.mxu0 0.0
    %308 = vmatprep.subr.mxu0 0.0
    %309 = vmatpush1.msra.mxu0 0.0
    %310 = vmatprep.subr.mxu0 0.0
    %311 = vmatpush1.msra.mxu0 0.0
    %312 = vmatprep.subr.mxu0 0.0
    %313 = vmatpush1.msra.mxu0 0.0
    %314 = vmatprep.subr.mxu0 0.0
    %315 = vmatpush1.msra.mxu0 0.0
    %316 = vmatprep.subr.mxu0 0.0
    %317 = vmatpush1.msra.mxu0 0.0
    %318 = vmatprep.subr.mxu0 0.0
    %319 = vmatpush1.msra.mxu0 0.0
    %320 = vmatprep.subr.mxu0 0.0
    %321 = vmatpush1.msra.mxu0 0.0
    %322 = vmatprep.subr.mxu0 0.0
    %323 = vmatpush1.msra.mxu0 0.0
    %324 = vmatprep.subr.mxu0 0.0
    %325 = vmatpush1.msra.mxu0 0.0
    %326 = vmatprep.subr.mxu0 0.0
    %327 = vmatpush1.msra.mxu0 0.0
    %328 = vmatprep.subr.mxu0 0.0
    %329 = vmatpush1.msra.mxu0 0.0
    %330 = vmatprep.subr.mxu0 0.0
    %331 = vmatpush1.msra.mxu0 0.0
    %332 = vmatprep.subr.mxu0 0.0
    %333 = vmatpush1.msra.mxu0 0.0
    %334 = vmatprep.subr.mxu0 0.0
    %335 = vmatpush1.msra.mxu0 0.0
    %336 = vmatprep.subr.mxu0 0.0
    %337 = vmatpush1.msra.mxu0 0.0
    %338 = vmatprep.subr.mxu0 0.0
    %339 = vmatpush1.msra.mxu0 0.0
    %340 = vmatprep.subr.mxu0 0.0
    %341 = vmatpush1.msra.mxu0 0.0
    %342 = vmatprep.subr.mxu0 0.0
    %343 = vmatpush1.msra.mxu0 0.0
    %344 = vmatprep.subr.mxu0 0.0
    %345 = vmatpush1.msra.mxu0 0.0
    %346 = vmatprep.subr.mxu0 0.0
    %347 = vmatpush1.msra.mxu0 0.0
    %348 = vmatprep.subr.mxu0 0.0
    %349 = vmatpush1.msra.mxu0 0.0
    %350 = vmatprep.subr.mxu0 0.0
    %351 = vmatpush1.msra.mxu0 0.0
    %352 = vmatprep.subr.mxu0 0.0
    %353 = vmatpush1.msra.mxu0 0.0
    %354 = vmatprep.mubr.f32.mxu0 0.0
    %v355 = vand.u32 %v52, 4294901760
    %v356 = vsub.f32 %v52, %v355
    %v357 = vand.u32 %v356, 4294901760
    %358 = vmatmul.mubr.f32.gmra.mrb[0].mxu0 %v357
    %v359 = vpop.f32.mrb[0].mxu0
    %v360 = vadd.f32 %v285, %v359
    %v361 = vpop.f32.mrb[0].mxu0
    %362 = vdwg.mxu0
    %363 = vmatprep.subr.mxu0 0.0
    %v364 = vand.u32 %v41, 4294901760
    %v365 = vsub.f32 %v41, %v364
    %v366 = vand.u32 %v365, 4294901760
    %367 = vmatpush1.msra.mxu0 %v366
    %368 = vmatprep.subr.mxu0 0.0
    %v369 = vand.u32 %v42, 4294901760
    %v370 = vsub.f32 %v42, %v369
    %v371 = vand.u32 %v370, 4294901760
    %372 = vmatpush1.msra.mxu0 %v371
    %373 = vmatprep.subr.mxu0 0.0
    %374 = vmatpush1.msra.mxu0 0.0
    %375 = vmatprep.subr.mxu0 0.0
    %376 = vmatpush1.msra.mxu0 0.0
    %377 = vmatprep.subr.mxu0 0.0
    %378 = vmatpush1.msra.mxu0 0.0
    %379 = vmatprep.subr.mxu0 0.0
    %380 = vmatpush1.msra.mxu0 0.0
    %381 = vmatprep.subr.mxu0 0.0
    %382 = vmatpush1.msra.mxu0 0.0
    %383 = vmatprep.subr.mxu0 0.0
    %384 = vmatpush1.msra.mxu0 0.0
    %385 = vmatprep.subr.mxu0 0.0
    %386 = vmatpush1.msra.mxu0 0.0
    %387 = vmatprep.subr.mxu0 0.0
    %388 = vmatpush1.msra.mxu0 0.0
    %389 = vmatprep.subr.mxu0 0.0
    %390 = vmatpush1.msra.mxu0 0.0
    %391 = vmatprep.subr.mxu0 0.0
    %392 = vmatpush1.msra.mxu0 0.0
    %393 = vmatprep.subr.mxu0 0.0
    %394 = vmatpush1.msra.mxu0 0.0
    %395 = vmatprep.subr.mxu0 0.0
    %396 = vmatpush1.msra.mxu0 0.0
    %397 = vmatprep.subr.mxu0 0.0
    %398 = vmatpush1.msra.mxu0 0.0
    %399 = vmatprep.subr.mxu0 0.0
    %400 = vmatpush1.msra.mxu0 0.0
    %401 = vmatprep.subr.mxu0 0.0
    %402 = vmatpush1.msra.mxu0 0.0
    %403 = vmatprep.subr.mxu0 0.0
    %404 = vmatpush1.msra.mxu0 0.0
    %405 = vmatprep.subr.mxu0 0.0
    %406 = vmatpush1.msra.mxu0 0.0
    %407 = vmatprep.subr.mxu0 0.0
    %408 = vmatpush1.msra.mxu0 0.0
    %409 = vmatprep.subr.mxu0 0.0
    %410 = vmatpush1.msra.mxu0 0.0
    %411 = vmatprep.subr.mxu0 0.0
    %412 = vmatpush1.msra.mxu0 0.0
    %413 = vmatprep.subr.mxu0 0.0
    %414 = vmatpush1.msra.mxu0 0.0
    %415 = vmatprep.subr.mxu0 0.0
    %416 = vmatpush1.msra.mxu0 0.0
    %417 = vmatprep.subr.mxu0 0.0
    %418 = vmatpush1.msra.mxu0 0.0
    %419 = vmatprep.subr.mxu0 0.0
    %420 = vmatpush1.msra.mxu0 0.0
    %421 = vmatprep.subr.mxu0 0.0
    %422 = vmatpush1.msra.mxu0 0.0
    %423 = vmatprep.subr.mxu0 0.0
    %424 = vmatpush1.msra.mxu0 0.0
    %425 = vmatprep.subr.mxu0 0.0
    %426 = vmatpush1.msra.mxu0 0.0
    %427 = vmatprep.subr.mxu0 0.0
    %428 = vmatpush1.msra.mxu0 0.0
    %429 = vmatprep.subr.mxu0 0.0
    %430 = vmatpush1.msra.mxu0 0.0
    %431 = vmatprep.subr.mxu0 0.0
    %432 = vmatpush1.msra.mxu0 0.0
    %433 = vmatprep.mubr.f32.mxu0 0.0
    %v434 = vand.u32 %v52, 4294901760
    %435 = vmatmul.mubr.f32.gmra.mrb[0].mxu0 %v434
    %v436 = vpop.f32.mrb[0].mxu0
    %v437 = vadd.f32 %v360, %v436
    %v438 = vpop.f32.mrb[0].mxu0
    %439 = vdwg.mxu0
    %440 = vmatprep.subr.mxu0 0.0
    %v441 = vand.u32 %v41, 4294901760
    %442 = vmatpush1.msra.mxu0 %v441
    %443 = vmatprep.subr.mxu0 0.0
    %v444 = vand.u32 %v42, 4294901760
    %445 = vmatpush1.msra.mxu0 %v444
    %446 = vmatprep.subr.mxu0 0.0
    %447 = vmatpush1.msra.mxu0 0.0
    %448 = vmatprep.subr.mxu0 0.0
    %449 = vmatpush1.msra.mxu0 0.0
    %450 = vmatprep.subr.mxu0 0.0
    %451 = vmatpush1.msra.mxu0 0.0
    %452 = vmatprep.subr.mxu0 0.0
    %453 = vmatpush1.msra.mxu0 0.0
    %454 = vmatprep.subr.mxu0 0.0
    %455 = vmatpush1.msra.mxu0 0.0
    %456 = vmatprep.subr.mxu0 0.0
    %457 = vmatpush1.msra.mxu0 0.0
    %458 = vmatprep.subr.mxu0 0.0
    %459 = vmatpush1.msra.mxu0 0.0
    %460 = vmatprep.subr.mxu0 0.0
    %461 = vmatpush1.msra.mxu0 0.0
    %462 = vmatprep.subr.mxu0 0.0
    %463 = vmatpush1.msra.mxu0 0.0
    %464 = vmatprep.subr.mxu0 0.0
    %465 = vmatpush1.msra.mxu0 0.0
    %466 = vmatprep.subr.mxu0 0.0
    %467 = vmatpush1.msra.mxu0 0.0
    %468 = vmatprep.subr.mxu0 0.0
    %469 = vmatpush1.msra.mxu0 0.0
    %470 = vmatprep.subr.mxu0 0.0
    %471 = vmatpush1.msra.mxu0 0.0
    %472 = vmatprep.subr.mxu0 0.0
    %473 = vmatpush1.msra.mxu0 0.0
    %474 = vmatprep.subr.mxu0 0.0
    %475 = vmatpush1.msra.mxu0 0.0
    %476 = vmatprep.subr.mxu0 0.0
    %477 = vmatpush1.msra.mxu0 0.0
    %478 = vmatprep.subr.mxu0 0.0
    %479 = vmatpush1.msra.mxu0 0.0
    %480 = vmatprep.subr.mxu0 0.0
    %481 = vmatpush1.msra.mxu0 0.0
    %482 = vmatprep.subr.mxu0 0.0
    %483 = vmatpush1.msra.mxu0 0.0
    %484 = vmatprep.subr.mxu0 0.0
    %485 = vmatpush1.msra.mxu0 0.0
    %486 = vmatprep.subr.mxu0 0.0
    %487 = vmatpush1.msra.mxu0 0.0
    %488 = vmatprep.subr.mxu0 0.0
    %489 = vmatpush1.msra.mxu0 0.0
    %490 = vmatprep.subr.mxu0 0.0
    %491 = vmatpush1.msra.mxu0 0.0
    %492 = vmatprep.subr.mxu0 0.0
    %493 = vmatpush1.msra.mxu0 0.0
    %494 = vmatprep.subr.mxu0 0.0
    %495 = vmatpush1.msra.mxu0 0.0
    %496 = vmatprep.subr.mxu0 0.0
    %497 = vmatpush1.msra.mxu0 0.0
    %498 = vmatprep.subr.mxu0 0.0
    %499 = vmatpush1.msra.mxu0 0.0
    %500 = vmatprep.subr.mxu0 0.0
    %501 = vmatpush1.msra.mxu0 0.0
    %502 = vmatprep.subr.mxu0 0.0
    %503 = vmatpush1.msra.mxu0 0.0
    %504 = vmatprep.subr.mxu0 0.0
    %505 = vmatpush1.msra.mxu0 0.0
    %506 = vmatprep.mubr.f32.mxu0 0.0
    %v507 = vand.u32 %v52, 4294901760
    %508 = vmatmul.mubr.f32.gmra.mrb[0].mxu0 %v507
    %v509 = vpop.f32.mrb[0].mxu0
    %v510 = vadd.f32 %v437, %v509
    %v511 = vpop.f32.mrb[0].mxu0
    %512 = vdwg.mxu0
    %v513 = vmax.f32 %v510, 0.0
    %v514 = vld [vmem:[%s3] sm:$0xff]
    %v515 = vld [vmem:[%s3 + $0x8] sm:$0xff]
    %v516 = vld [vmem:[%s3 + $0x10] sm:$0xff]
    %v517 = vld [vmem:[%s3 + $0x18] sm:$0xff]
    %v518 = vld [vmem:[%s3 + $0x20] sm:$0xff]
    %v519 = vld [vmem:[%s3 + $0x28] sm:$0xff]
    %v520 = vld [vmem:[%s3 + $0x30] sm:$0xff]
    %v521 = vld [vmem:[%s3 + $0x38] sm:$0xff]
    %v522 = vld [vmem:[%s4] sm:$0x1]
    %v524 = vlaneseq
    %v525 = vshrl.u32 %v524, 7
    %v526 = vsub.s32 0, %v525
    %v527 = vrot.slane %v522, %v526
    %vm529 = vcmask 523264
    %v531 = vsel %vm529, %v513, 0
    %533 = vmatprep.subr.mxu0 0.0
    %v534 = vand.u32 %v514, 4294901760
    %535 = vmatpush1.msra.mxu0 %v534
    %536 = vmatprep.subr.mxu0 0.0
    %v537 = vand.u32 %v515, 4294901760
    %538 = vmatpush1.msra.mxu0 %v537
    %539 = vmatprep.subr.mxu0 0.0
    %v540 = vand.u32 %v516, 4294901760
    %541 = vmatpush1.msra.mxu0 %v540
    %542 = vmatprep.subr.mxu0 0.0
    %v543 = vand.u32 %v517, 4294901760
    %544 = vmatpush1.msra.mxu0 %v543
    %545 = vmatprep.subr.mxu0 0.0
    %v546 = vand.u32 %v518, 4294901760
    %547 = vmatpush1.msra.mxu0 %v546
    %548 = vmatprep.subr.mxu0 0.0
    %v549 = vand.u32 %v519, 4294901760
    %550 = vmatpush1.msra.mxu0 %v549
    %551 = vmatprep.subr.mxu0 0.0
    %v552 = vand.u32 %v520, 4294901760
    %553 = vmatpush1.msra.mxu0 %v552
    %554 = vmatprep.subr.mxu0 0.0
    %v555 = vand.u32 %v521, 4294901760
    %556 = vmatpush1.msra.mxu0 %v555
    %557 = vmatprep.subr.mxu0 0.0
    %558 = vmatpush1.msra.mxu0 0.0
    %559 = vmatprep.subr.mxu0 0.0
    %560 = vmatpush1.msra.mxu0 0.0
    %561 = vmatprep.subr.mxu0 0.0
    %562 = vmatpush1.msra.mxu0 0.0
    %563 = vmatprep.subr.mxu0 0.0
    %564 = vmatpush1.msra.mxu0 0.0
    %565 = vmatprep.subr.mxu0 0.0
    %566 = vmatpush1.msra.mxu0 0.0
    %567 = vmatprep.subr.mxu0 0.0
    %568 = vmatpush1.msra.mxu0 0.0
    %569 = vmatprep.subr.mxu0 0.0
    %570 = vmatpush1.msra.mxu0 0.0
    %571 = vmatprep.subr.mxu0 0.0
    %572 = vmatpush1.msra.mxu0 0.0
    %573 = vmatprep.subr.mxu0 0.0
    %574 = vmatpush1.msra.mxu0 0.0
    %575 = vmatprep.subr.mxu0 0.0
    %576 = vmatpush1.msra.mxu0 0.0
    %577 = vmatprep.subr.mxu0 0.0
    %578 = vmatpush1.msra.mxu0 0.0
    %579 = vmatprep.subr.mxu0 0.0
    %580 = vmatpush1.msra.mxu0 0.0
    %581 = vmatprep.subr.mxu0 0.0
    %582 = vmatpush1.msra.mxu0 0.0
    %583 = vmatprep.subr.mxu0 0.0
    %584 = vmatpush1.msra.mxu0 0.0
    %585 = vmatprep.subr.mxu0 0.0
    %586 = vmatpush1.msra.mxu0 0.0
    %587 = vmatprep.subr.mxu0 0.0
    %588 = vmatpush1.msra.mxu0 0.0
    %589 = vmatprep.subr.mxu0 0.0
    %590 = vmatpush1.msra.mxu0 0.0
    %591 = vmatprep.subr.mxu0 0.0
    %592 = vmatpush1.msra.mxu0 0.0
    %593 = vmatprep.subr.mxu0 0.0
    %594 = vmatpush1.msra.mxu0 0.0
    %595 = vmatprep.subr.mxu0 0.0
    %596 = vmatpush1.msra.mxu0 0.0
    %597 = vmatprep.subr.mxu0 0.0
    %598 = vmatpush1.msra.mxu0 0.0
    %599 = vmatprep.subr.mxu0 0.0
    %600 = vmatpush1.msra.mxu0 0.0
    %601 = vmatprep.subr.mxu0 0.0
    %602 = vmatpush1.msra.mxu0 0.0
    %603 = vmatprep.subr.mxu0 0.0
    %604 = vmatpush1.msra.mxu0 0.0
    %605 = vmatprep.mubr.f32.mxu0 0.0
    %v606 = vand.u32 %v531, 4294901760
    %v607 = vsub.f32 %v531, %v606
    %v608 = vand.u32 %v607, 4294901760
    %v609 = vsub.f32 %v607, %v608
    %v610 = vand.u32 %v609, 4294901760
    %611 = vmatmul.mubr.f32.gmra.mrb[0].mxu0 %v610
    %v612 = vpop.f32.mrb[0].mxu0
    %v613 = vadd.f32 %v527, %v612
    %v614 = vpop.f32.mrb[0].mxu0
    %615 = vdwg.mxu0
    %616 = vmatprep.subr.mxu0 0.0
    %v617 = vand.u32 %v514, 4294901760
    %v618 = vsub.f32 %v514, %v617
    %v619 = vand.u32 %v618, 4294901760
    %v620 = vsub.f32 %v618, %v619
    %v621 = vand.u32 %v620, 4294901760
    %622 = vmatpush1.msra.mxu0 %v621
    %623 = vmatprep.subr.mxu0 0.0
    %v624 = vand.u32 %v515, 4294901760
    %v625 = vsub.f32 %v515, %v624
    %v626 = vand.u32 %v625, 4294901760
    %v627 = vsub.f32 %v625, %v626
    %v628 = vand.u32 %v627, 4294901760
    %629 = vmatpush1.msra.mxu0 %v628
    %630 = vmatprep.subr.mxu0 0.0
    %v631 = vand.u32 %v516, 4294901760
    %v632 = vsub.f32 %v516, %v631
    %v633 = vand.u32 %v632, 4294901760
    %v634 = vsub.f32 %v632, %v633
    %v635 = vand.u32 %v634, 4294901760
    %636 = vmatpush1.msra.mxu0 %v635
    %637 = vmatprep.subr.mxu0 0.0
    %v638 = vand.u32 %v517, 4294901760
    %v639 = vsub.f32 %v517, %v638
    %v640 = vand.u32 %v639, 4294901760
    %v641 = vsub.f32 %v639, %v640
    %v642 = vand.u32 %v641, 4294901760
    %643 = vmatpush1.msra.mxu0 %v642
    %644 = vmatprep.subr.mxu0 0.0
    %v645 = vand.u32 %v518, 4294901760
    %v646 = vsub.f32 %v518, %v645
    %v647 = vand.u32 %v646, 4294901760
    %v648 = vsub.f32 %v646, %v647
    %v649 = vand.u32 %v648, 4294901760
    %650 = vmatpush1.msra.mxu0 %v649
    %651 = vmatprep.subr.mxu0 0.0
    %v652 = vand.u32 %v519, 4294901760
    %v653 = vsub.f32 %v519, %v652
    %v654 = vand.u32 %v653, 4294901760
    %v655 = vsub.f32 %v653, %v654
    %v656 = vand.u32 %v655, 4294901760
    %657 = vmatpush1.msra.mxu0 %v656
    %658 = vmatprep.subr.mxu0 0.0
    %v659 = vand.u32 %v520, 4294901760
    %v660 = vsub.f32 %v520, %v659
    %v661 = vand.u32 %v660, 4294901760
    %v662 = vsub.f32 %v660, %v661
    %v663 = vand.u32 %v662, 4294901760
    %664 = vmatpush1.msra.mxu0 %v663
    %665 = vmatprep.subr.mxu0 0.0
    %v666 = vand.u32 %v521, 4294901760
    %v667 = vsub.f32 %v521, %v666
    %v668 = vand.u32 %v667, 4294901760
    %v669 = vsub.f32 %v667, %v668
    %v670 = vand.u32 %v669, 4294901760
    %671 = vmatpush1.msra.mxu0 %v670
    %672 = vmatprep.subr.mxu0 0.0
    %673 = vmatpush1.msra.mxu0 0.0
    %674 = vmatprep.subr.mxu0 0.0
    %675 = vmatpush1.msra.mxu0 0.0
    %676 = vmatprep.subr.mxu0 0.0
    %677 = vmatpush1.msra.mxu0 0.0
    %678 = vmatprep.subr.mxu0 0.0
    %679 = vmatpush1.msra.mxu0 0.0
    %680 = vmatprep.subr.mxu0 0.0
    %681 = vmatpush1.msra.mxu0 0.0
    %682 = vmatprep.subr.mxu0 0.0
    %683 = vmatpush1.msra.mxu0 0.0
    %684 = vmatprep.subr.mxu0 0.0
    %685 = vmatpush1.msra.mxu0 0.0
    %686 = vmatprep.subr.mxu0 0.0
    %687 = vmatpush1.msra.mxu0 0.0
    %688 = vmatprep.subr.mxu0 0.0
    %689 = vmatpush1.msra.mxu0 0.0
    %690 = vmatprep.subr.mxu0 0.0
    %691 = vmatpush1.msra.mxu0 0.0
    %692 = vmatprep.subr.mxu0 0.0
    %693 = vmatpush1.msra.mxu0 0.0
    %694 = vmatprep.subr.mxu0 0.0
    %695 = vmatpush1.msra.mxu0 0.0
    %696 = vmatprep.subr.mxu0 0.0
    %697 = vmatpush1.msra.mxu0 0.0
    %698 = vmatprep.subr.mxu0 0.0
    %699 = vmatpush1.msra.mxu0 0.0
    %700 = vmatprep.subr.mxu0 0.0
    %701 = vmatpush1.msra.mxu0 0.0
    %702 = vmatprep.subr.mxu0 0.0
    %703 = vmatpush1.msra.mxu0 0.0
    %704 = vmatprep.subr.mxu0 0.0
    %705 = vmatpush1.msra.mxu0 0.0
    %706 = vmatprep.subr.mxu0 0.0
    %707 = vmatpush1.msra.mxu0 0.0
    %708 = vmatprep.subr.mxu0 0.0
    %709 = vmatpush1.msra.mxu0 0.0
    %710 = vmatprep.subr.mxu0 0.0
    %711 = vmatpush1.msra.mxu0 0.0
    %712 = vmatprep.subr.mxu0 0.0
    %713 = vmatpush1.msra.mxu0 0.0
    %714 = vmatprep.subr.mxu0 0.0
    %715 = vmatpush1.msra.mxu0 0.0
    %716 = vmatprep.subr.mxu0 0.0
    %717 = vmatpush1.msra.mxu0 0.0
    %718 = vmatprep.subr.mxu0 0.0
    %719 = vmatpush1.msra.mxu0 0.0
    %720 = vmatprep.mubr.f32.mxu0 0.0
    %v721 = vand.u32 %v531, 4294901760
    %722 = vmatmul.mubr.f32.gmra.mrb[0].mxu0 %v721
    %v723 = vpop.f32.mrb[0].mxu0
    %v724 = vadd.f32 %v613, %v723
    %v725 = vpop.f32.mrb[0].mxu0
    %726 = vdwg.mxu0
    %727 = vmatprep.subr.mxu0 0.0
    %v728 = vand.u32 %v514, 4294901760
    %v729 = vsub.f32 %v514, %v728
    %730 = vmatpush1.msra.mxu0 %v729
    %731 = vmatprep.subr.mxu0 0.0
    %v732 = vand.u32 %v515, 4294901760
    %v733 = vsub.f32 %v515, %v732
    %734 = vmatpush1.msra.mxu0 %v733
    %735 = vmatprep.subr.mxu0 0.0
    %v736 = vand.u32 %v516, 4294901760
    %v737 = vsub.f32 %v516, %v736
    %738 = vmatpush1.msra.mxu0 %v737
    %739 = vmatprep.subr.mxu0 0.0
    %v740 = vand.u32 %v517, 4294901760
    %v741 = vsub.f32 %v517, %v740
    %742 = vmatpush1.msra.mxu0 %v741
    %743 = vmatprep.subr.mxu0 0.0
    %v744 = vand.u32 %v518, 4294901760
    %v745 = vsub.f32 %v518, %v744
    %746 = vmatpush1.msra.mxu0 %v745
    %747 = vmatprep.subr.mxu0 0.0
    %v748 = vand.u32 %v519, 4294901760
    %v749 = vsub.f32 %v519, %v748
    %750 = vmatpush1.msra.mxu0 %v749
    %751 = vmatprep.subr.mxu0 0.0
    %v752 = vand.u32 %v520, 4294901760
    %v753 = vsub.f32 %v520, %v752
    %754 = vmatpush1.msra.mxu0 %v753
    %755 = vmatprep.subr.mxu0 0.0
    %v756 = vand.u32 %v521, 4294901760
    %v757 = vsub.f32 %v521, %v756
    %758 = vmatpush1.msra.mxu0 %v757
    %759 = vmatprep.subr.mxu0 0.0
    %760 = vmatpush1.msra.mxu0 0.0
    %761 = vmatprep.subr.mxu0 0.0
    %762 = vmatpush1.msra.mxu0 0.0
    %763 = vmatprep.subr.mxu0 0.0
    %764 = vmatpush1.msra.mxu0 0.0
    %765 = vmatprep.subr.mxu0 0.0
    %766 = vmatpush1.msra.mxu0 0.0
    %767 = vmatprep.subr.mxu0 0.0
    %768 = vmatpush1.msra.mxu0 0.0
    %769 = vmatprep.subr.mxu0 0.0
    %770 = vmatpush1.msra.mxu0 0.0
    %771 = vmatprep.subr.mxu0 0.0
    %772 = vmatpush1.msra.mxu0 0.0
    %773 = vmatprep.subr.mxu0 0.0
    %774 = vmatpush1.msra.mxu0 0.0
    %775 = vmatprep.subr.mxu0 0.0
    %776 = vmatpush1.msra.mxu0 0.0
    %777 = vmatprep.subr.mxu0 0.0
    %778 = vmatpush1.msra.mxu0 0.0
    %779 = vmatprep.subr.mxu0 0.0
    %780 = vmatpush1.msra.mxu0 0.0
    %781 = vmatprep.subr.mxu0 0.0
    %782 = vmatpush1.msra.mxu0 0.0
    %783 = vmatprep.subr.mxu0 0.0
    %784 = vmatpush1.msra.mxu0 0.0
    %785 = vmatprep.subr.mxu0 0.0
    %786 = vmatpush1.msra.mxu0 0.0
    %787 = vmatprep.subr.mxu0 0.0
    %788 = vmatpush1.msra.mxu0 0.0
    %789 = vmatprep.subr.mxu0 0.0
    %790 = vmatpush1.msra.mxu0 0.0
    %791 = vmatprep.subr.mxu0 0.0
    %792 = vmatpush1.msra.mxu0 0.0
    %793 = vmatprep.subr.mxu0 0.0
    %794 = vmatpush1.msra.mxu0 0.0
    %795 = vmatprep.subr.mxu0 0.0
    %796 = vmatpush1.msra.mxu0 0.0
    %797 = vmatprep.subr.mxu0 0.0
    %798 = vmatpush1.msra.mxu0 0.0
    %799 = vmatprep.subr.mxu0 0.0
    %800 = vmatpush1.msra.mxu0 0.0
    %801 = vmatprep.subr.mxu0 0.0
    %802 = vmatpush1.msra.mxu0 0.0
    %803 = vmatprep.subr.mxu0 0.0
    %804 = vmatpush1.msra.mxu0 0.0
    %805 = vmatprep.subr.mxu0 0.0
    %806 = vmatpush1.msra.mxu0 0.0
    %807 = vmatprep.mubr.f32.mxu0 0.0
    %v808 = vand.u32 %v531, 4294901760
    %v809 = vsub.f32 %v531, %v808
    %810 = vmatmul.mubr.f32.gmra.mrb[0].mxu0 %v809
    %v811 = vpop.f32.mrb[0].mxu0
    %v812 = vadd.f32 %v724, %v811
    %v813 = vpop.f32.mrb[0].mxu0
    %814 = vdwg.mxu0
    %815 = vmatprep.subr.mxu0 0.0
    %v816 = vand.u32 %v514, 4294901760
    %817 = vmatpush1.msra.mxu0 %v816
    %818 = vmatprep.subr.mxu0 0.0
    %v819 = vand.u32 %v515, 4294901760
    %820 = vmatpush1.msra.mxu0 %v819
    %821 = vmatprep.subr.mxu0 0.0
    %v822 = vand.u32 %v516, 4294901760
    %823 = vmatpush1.msra.mxu0 %v822
    %824 = vmatprep.subr.mxu0 0.0
    %v825 = vand.u32 %v517, 4294901760
    %826 = vmatpush1.msra.mxu0 %v825
    %827 = vmatprep.subr.mxu0 0.0
    %v828 = vand.u32 %v518, 4294901760
    %829 = vmatpush1.msra.mxu0 %v828
    %830 = vmatprep.subr.mxu0 0.0
    %v831 = vand.u32 %v519, 4294901760
    %832 = vmatpush1.msra.mxu0 %v831
    %833 = vmatprep.subr.mxu0 0.0
    %v834 = vand.u32 %v520, 4294901760
    %835 = vmatpush1.msra.mxu0 %v834
    %836 = vmatprep.subr.mxu0 0.0
    %v837 = vand.u32 %v521, 4294901760
    %838 = vmatpush1.msra.mxu0 %v837
    %839 = vmatprep.subr.mxu0 0.0
    %840 = vmatpush1.msra.mxu0 0.0
    %841 = vmatprep.subr.mxu0 0.0
    %842 = vmatpush1.msra.mxu0 0.0
    %843 = vmatprep.subr.mxu0 0.0
    %844 = vmatpush1.msra.mxu0 0.0
    %845 = vmatprep.subr.mxu0 0.0
    %846 = vmatpush1.msra.mxu0 0.0
    %847 = vmatprep.subr.mxu0 0.0
    %848 = vmatpush1.msra.mxu0 0.0
    %849 = vmatprep.subr.mxu0 0.0
    %850 = vmatpush1.msra.mxu0 0.0
    %851 = vmatprep.subr.mxu0 0.0
    %852 = vmatpush1.msra.mxu0 0.0
    %853 = vmatprep.subr.mxu0 0.0
    %854 = vmatpush1.msra.mxu0 0.0
    %855 = vmatprep.subr.mxu0 0.0
    %856 = vmatpush1.msra.mxu0 0.0
    %857 = vmatprep.subr.mxu0 0.0
    %858 = vmatpush1.msra.mxu0 0.0
    %859 = vmatprep.subr.mxu0 0.0
    %860 = vmatpush1.msra.mxu0 0.0
    %861 = vmatprep.subr.mxu0 0.0
    %862 = vmatpush1.msra.mxu0 0.0
    %863 = vmatprep.subr.mxu0 0.0
    %864 = vmatpush1.msra.mxu0 0.0
    %865 = vmatprep.subr.mxu0 0.0
    %866 = vmatpush1.msra.mxu0 0.0
    %867 = vmatprep.subr.mxu0 0.0
    %868 = vmatpush1.msra.mxu0 0.0
    %869 = vmatprep.subr.mxu0 0.0
    %870 = vmatpush1.msra.mxu0 0.0
    %871 = vmatprep.subr.mxu0 0.0
    %872 = vmatpush1.msra.mxu0 0.0
    %873 = vmatprep.subr.mxu0 0.0
    %874 = vmatpush1.msra.mxu0 0.0
    %875 = vmatprep.subr.mxu0 0.0
    %876 = vmatpush1.msra.mxu0 0.0
    %877 = vmatprep.subr.mxu0 0.0
    %878 = vmatpush1.msra.mxu0 0.0
    %879 = vmatprep.subr.mxu0 0.0
    %880 = vmatpush1.msra.mxu0 0.0
    %881 = vmatprep.subr.mxu0 0.0
    %882 = vmatpush1.msra.mxu0 0.0
    %883 = vmatprep.subr.mxu0 0.0
    %884 = vmatpush1.msra.mxu0 0.0
    %885 = vmatprep.subr.mxu0 0.0
    %886 = vmatpush1.msra.mxu0 0.0
    %887 = vmatprep.mubr.f32.mxu0 0.0
    %v888 = vand.u32 %v531, 4294901760
    %v889 = vsub.f32 %v531, %v888
    %v890 = vand.u32 %v889, 4294901760
    %891 = vmatmul.mubr.f32.gmra.mrb[0].mxu0 %v890
    %v892 = vpop.f32.mrb[0].mxu0
    %v893 = vadd.f32 %v812, %v892
    %v894 = vpop.f32.mrb[0].mxu0
    %895 = vdwg.mxu0
    %896 = vmatprep.subr.mxu0 0.0
    %v897 = vand.u32 %v514, 4294901760
    %v898 = vsub.f32 %v514, %v897
    %v899 = vand.u32 %v898, 4294901760
    %900 = vmatpush1.msra.mxu0 %v899
    %901 = vmatprep.subr.mxu0 0.0
    %v902 = vand.u32 %v515, 4294901760
    %v903 = vsub.f32 %v515, %v902
    %v904 = vand.u32 %v903, 4294901760
    %905 = vmatpush1.msra.mxu0 %v904
    %906 = vmatprep.subr.mxu0 0.0
    %v907 = vand.u32 %v516, 4294901760
    %v908 = vsub.f32 %v516, %v907
    %v909 = vand.u32 %v908, 4294901760
    %910 = vmatpush1.msra.mxu0 %v909
    %911 = vmatprep.subr.mxu0 0.0
    %v912 = vand.u32 %v517, 4294901760
    %v913 = vsub.f32 %v517, %v912
    %v914 = vand.u32 %v913, 4294901760
    %915 = vmatpush1.msra.mxu0 %v914
    %916 = vmatprep.subr.mxu0 0.0
    %v917 = vand.u32 %v518, 4294901760
    %v918 = vsub.f32 %v518, %v917
    %v919 = vand.u32 %v918, 4294901760
    %920 = vmatpush1.msra.mxu0 %v919
    %921 = vmatprep.subr.mxu0 0.0
    %v922 = vand.u32 %v519, 4294901760
    %v923 = vsub.f32 %v519, %v922
    %v924 = vand.u32 %v923, 4294901760
    %925 = vmatpush1.msra.mxu0 %v924
    %926 = vmatprep.subr.mxu0 0.0
    %v927 = vand.u32 %v520, 4294901760
    %v928 = vsub.f32 %v520, %v927
    %v929 = vand.u32 %v928, 4294901760
    %930 = vmatpush1.msra.mxu0 %v929
    %931 = vmatprep.subr.mxu0 0.0
    %v932 = vand.u32 %v521, 4294901760
    %v933 = vsub.f32 %v521, %v932
    %v934 = vand.u32 %v933, 4294901760
    %935 = vmatpush1.msra.mxu0 %v934
    %936 = vmatprep.subr.mxu0 0.0
    %937 = vmatpush1.msra.mxu0 0.0
    %938 = vmatprep.subr.mxu0 0.0
    %939 = vmatpush1.msra.mxu0 0.0
    %940 = vmatprep.subr.mxu0 0.0
    %941 = vmatpush1.msra.mxu0 0.0
    %942 = vmatprep.subr.mxu0 0.0
    %943 = vmatpush1.msra.mxu0 0.0
    %944 = vmatprep.subr.mxu0 0.0
    %945 = vmatpush1.msra.mxu0 0.0
    %946 = vmatprep.subr.mxu0 0.0
    %947 = vmatpush1.msra.mxu0 0.0
    %948 = vmatprep.subr.mxu0 0.0
    %949 = vmatpush1.msra.mxu0 0.0
    %950 = vmatprep.subr.mxu0 0.0
    %951 = vmatpush1.msra.mxu0 0.0
    %952 = vmatprep.subr.mxu0 0.0
    %953 = vmatpush1.msra.mxu0 0.0
    %954 = vmatprep.subr.mxu0 0.0
    %955 = vmatpush1.msra.mxu0 0.0
    %956 = vmatprep.subr.mxu0 0.0
    %957 = vmatpush1.msra.mxu0 0.0
    %958 = vmatprep.subr.mxu0 0.0
    %959 = vmatpush1.msra.mxu0 0.0
    %960 = vmatprep.subr.mxu0 0.0
    %961 = vmatpush1.msra.mxu0 0.0
    %962 = vmatprep.subr.mxu0 0.0
    %963 = vmatpush1.msra.mxu0 0.0
    %964 = vmatprep.subr.mxu0 0.0
    %965 = vmatpush1.msra.mxu0 0.0
    %966 = vmatprep.subr.mxu0 0.0
    %967 = vmatpush1.msra.mxu0 0.0
    %968 = vmatprep.subr.mxu0 0.0
    %969 = vmatpush1.msra.mxu0 0.0
    %970 = vmatprep.subr.mxu0 0.0
    %971 = vmatpush1.msra.mxu0 0.0
    %972 = vmatprep.subr.mxu0 0.0
    %973 = vmatpush1.msra.mxu0 0.0
    %974 = vmatprep.subr.mxu0 0.0
    %975 = vmatpush1.msra.mxu0 0.0
    %976 = vmatprep.subr.mxu0 0.0
    %977 = vmatpush1.msra.mxu0 0.0
    %978 = vmatprep.subr.mxu0 0.0
    %979 = vmatpush1.msra.mxu0 0.0
    %980 = vmatprep.subr.mxu0 0.0
    %981 = vmatpush1.msra.mxu0 0.0
    %982 = vmatprep.subr.mxu0 0.0
    %983 = vmatpush1.msra.mxu0 0.0
    %984 = vmatprep.mubr.f32.mxu0 0.0
    %v985 = vand.u32 %v531, 4294901760
    %986 = vmatmul.mubr.f32.gmra.mrb[0].mxu0 %v985
    %v987 = vpop.f32.mrb[0].mxu0
    %v988 = vadd.f32 %v893, %v987
    %v989 = vpop.f32.mrb[0].mxu0
    %990 = vdwg.mxu0
    %991 = vmatprep.subr.mxu0 0.0
    %v992 = vand.u32 %v514, 4294901760
    %993 = vmatpush1.msra.mxu0 %v992
    %994 = vmatprep.subr.mxu0 0.0
    %v995 = vand.u32 %v515, 4294901760
    %996 = vmatpush1.msra.mxu0 %v995
    %997 = vmatprep.subr.mxu0 0.0
    %v998 = vand.u32 %v516, 4294901760
    %999 = vmatpush1.msra.mxu0 %v998
    %1000 = vmatprep.subr.mxu0 0.0
    %v1001 = vand.u32 %v517, 4294901760
    %1002 = vmatpush1.msra.mxu0 %v1001
    %1003 = vmatprep.subr.mxu0 0.0
    %v1004 = vand.u32 %v518, 4294901760
    %1005 = vmatpush1.msra.mxu0 %v1004
    %1006 = vmatprep.subr.mxu0 0.0
    %v1007 = vand.u32 %v519, 4294901760
    %1008 = vmatpush1.msra.mxu0 %v1007
    %1009 = vmatprep.subr.mxu0 0.0
    %v1010 = vand.u32 %v520, 4294901760
    %1011 = vmatpush1.msra.mxu0 %v1010
    %1012 = vmatprep.subr.mxu0 0.0
    %v1013 = vand.u32 %v521, 4294901760
    %1014 = vmatpush1.msra.mxu0 %v1013
    %1015 = vmatprep.subr.mxu0 0.0
    %1016 = vmatpush1.msra.mxu0 0.0
    %1017 = vmatprep.subr.mxu0 0.0
    %1018 = vmatpush1.msra.mxu0 0.0
    %1019 = vmatprep.subr.mxu0 0.0
    %1020 = vmatpush1.msra.mxu0 0.0
    %1021 = vmatprep.subr.mxu0 0.0
    %1022 = vmatpush1.msra.mxu0 0.0
    %1023 = vmatprep.subr.mxu0 0.0
    %1024 = vmatpush1.msra.mxu0 0.0
    %1025 = vmatprep.subr.mxu0 0.0
    %1026 = vmatpush1.msra.mxu0 0.0
    %1027 = vmatprep.subr.mxu0 0.0
    %1028 = vmatpush1.msra.mxu0 0.0
    %1029 = vmatprep.subr.mxu0 0.0
    %1030 = vmatpush1.msra.mxu0 0.0
    %1031 = vmatprep.subr.mxu0 0.0
    %1032 = vmatpush1.msra.mxu0 0.0
    %1033 = vmatprep.subr.mxu0 0.0
    %1034 = vmatpush1.msra.mxu0 0.0
    %1035 = vmatprep.subr.mxu0 0.0
    %1036 = vmatpush1.msra.mxu0 0.0
    %1037 = vmatprep.subr.mxu0 0.0
    %1038 = vmatpush1.msra.mxu0 0.0
    %1039 = vmatprep.subr.mxu0 0.0
    %1040 = vmatpush1.msra.mxu0 0.0
    %1041 = vmatprep.subr.mxu0 0.0
    %1042 = vmatpush1.msra.mxu0 0.0
    %1043 = vmatprep.subr.mxu0 0.0
    %1044 = vmatpush1.msra.mxu0 0.0
    %1045 = vmatprep.subr.mxu0 0.0
    %1046 = vmatpush1.msra.mxu0 0.0
    %1047 = vmatprep.subr.mxu0 0.0
    %1048 = vmatpush1.msra.mxu0 0.0
    %1049 = vmatprep.subr.mxu0 0.0
    %1050 = vmatpush1.msra.mxu0 0.0
    %1051 = vmatprep.subr.mxu0 0.0
    %1052 = vmatpush1.msra.mxu0 0.0
    %1053 = vmatprep.subr.mxu0 0.0
    %1054 = vmatpush1.msra.mxu0 0.0
    %1055 = vmatprep.subr.mxu0 0.0
    %1056 = vmatpush1.msra.mxu0 0.0
    %1057 = vmatprep.subr.mxu0 0.0
    %1058 = vmatpush1.msra.mxu0 0.0
    %1059 = vmatprep.subr.mxu0 0.0
    %1060 = vmatpush1.msra.mxu0 0.0
    %1061 = vmatprep.subr.mxu0 0.0
    %1062 = vmatpush1.msra.mxu0 0.0
    %1063 = vmatprep.mubr.f32.mxu0 0.0
    %v1064 = vand.u32 %v531, 4294901760
    %1065 = vmatmul.mubr.f32.gmra.mrb[0].mxu0 %v1064
    %v1066 = vpop.f32.mrb[0].mxu0
    %v1067 = vadd.f32 %v988, %v1066
    %v1068 = vpop.f32.mrb[0].mxu0
    %1069 = vdwg.mxu0
    %v1070 = vmax.f32 %v1067, 0.0
    %v1071 = vld [vmem:[%s5] sm:$0xff]
    %v1072 = vld [vmem:[%s5 + $0x8] sm:$0xff]
    %v1073 = vld [vmem:[%s5 + $0x10] sm:$0xff]
    %v1074 = vld [vmem:[%s5 + $0x18] sm:$0xff]
    %v1075 = vld [vmem:[%s5 + $0x20] sm:$0xff]
    %v1076 = vld [vmem:[%s5 + $0x28] sm:$0xff]
    %v1077 = vld [vmem:[%s5 + $0x30] sm:$0xff]
    %v1078 = vld [vmem:[%s5 + $0x38] sm:$0xff]
    %v1079 = vld [vmem:[%s6] sm:$0x1]
    %v1081 = vlaneseq
    %v1082 = vshrl.u32 %v1081, 7
    %v1083 = vsub.s32 0, %v1082
    %v1084 = vrot.slane %v1079, %v1083
    %v1087 = vsel %vm529, %v1070, 0
    %1089 = vmatprep.subr.mxu0 0.0
    %v1090 = vand.u32 %v1071, 4294901760
    %1091 = vmatpush1.msra.mxu0 %v1090
    %1092 = vmatprep.subr.mxu0 0.0
    %v1093 = vand.u32 %v1072, 4294901760
    %1094 = vmatpush1.msra.mxu0 %v1093
    %1095 = vmatprep.subr.mxu0 0.0
    %v1096 = vand.u32 %v1073, 4294901760
    %1097 = vmatpush1.msra.mxu0 %v1096
    %1098 = vmatprep.subr.mxu0 0.0
    %v1099 = vand.u32 %v1074, 4294901760
    %1100 = vmatpush1.msra.mxu0 %v1099
    %1101 = vmatprep.subr.mxu0 0.0
    %v1102 = vand.u32 %v1075, 4294901760
    %1103 = vmatpush1.msra.mxu0 %v1102
    %1104 = vmatprep.subr.mxu0 0.0
    %v1105 = vand.u32 %v1076, 4294901760
    %1106 = vmatpush1.msra.mxu0 %v1105
    %1107 = vmatprep.subr.mxu0 0.0
    %v1108 = vand.u32 %v1077, 4294901760
    %1109 = vmatpush1.msra.mxu0 %v1108
    %1110 = vmatprep.subr.mxu0 0.0
    %v1111 = vand.u32 %v1078, 4294901760
    %1112 = vmatpush1.msra.mxu0 %v1111
    %1113 = vmatprep.subr.mxu0 0.0
    %1114 = vmatpush1.msra.mxu0 0.0
    %1115 = vmatprep.subr.mxu0 0.0
    %1116 = vmatpush1.msra.mxu0 0.0
    %1117 = vmatprep.subr.mxu0 0.0
    %1118 = vmatpush1.msra.mxu0 0.0
    %1119 = vmatprep.subr.mxu0 0.0
    %1120 = vmatpush1.msra.mxu0 0.0
    %1121 = vmatprep.subr.mxu0 0.0
    %1122 = vmatpush1.msra.mxu0 0.0
    %1123 = vmatprep.subr.mxu0 0.0
    %1124 = vmatpush1.msra.mxu0 0.0
    %1125 = vmatprep.subr.mxu0 0.0
    %1126 = vmatpush1.msra.mxu0 0.0
    %1127 = vmatprep.subr.mxu0 0.0
    %1128 = vmatpush1.msra.mxu0 0.0
    %1129 = vmatprep.subr.mxu0 0.0
    %1130 = vmatpush1.msra.mxu0 0.0
    %1131 = vmatprep.subr.mxu0 0.0
    %1132 = vmatpush1.msra.mxu0 0.0
    %1133 = vmatprep.subr.mxu0 0.0
    %1134 = vmatpush1.msra.mxu0 0.0
    %1135 = vmatprep.subr.mxu0 0.0
    %1136 = vmatpush1.msra.mxu0 0.0
    %1137 = vmatprep.subr.mxu0 0.0
    %1138 = vmatpush1.msra.mxu0 0.0
    %1139 = vmatprep.subr.mxu0 0.0
    %1140 = vmatpush1.msra.mxu0 0.0
    %1141 = vmatprep.subr.mxu0 0.0
    %1142 = vmatpush1.msra.mxu0 0.0
    %1143 = vmatprep.subr.mxu0 0.0
    %1144 = vmatpush1.msra.mxu0 0.0
    %1145 = vmatprep.subr.mxu0 0.0
    %1146 = vmatpush1.msra.mxu0 0.0
    %1147 = vmatprep.subr.mxu0 0.0
    %1148 = vmatpush1.msra.mxu0 0.0
    %1149 = vmatprep.subr.mxu0 0.0
    %1150 = vmatpush1.msra.mxu0 0.0
    %1151 = vmatprep.subr.mxu0 0.0
    %1152 = vmatpush1.msra.mxu0 0.0
    %1153 = vmatprep.subr.mxu0 0.0
    %1154 = vmatpush1.msra.mxu0 0.0
    %1155 = vmatprep.subr.mxu0 0.0
    %1156 = vmatpush1.msra.mxu0 0.0
    %1157 = vmatprep.subr.mxu0 0.0
    %1158 = vmatpush1.msra.mxu0 0.0
    %1159 = vmatprep.subr.mxu0 0.0
    %1160 = vmatpush1.msra.mxu0 0.0
    %1161 = vmatprep.mubr.f32.mxu0 0.0
    %v1162 = vand.u32 %v1087, 4294901760
    %v1163 = vsub.f32 %v1087, %v1162
    %v1164 = vand.u32 %v1163, 4294901760
    %v1165 = vsub.f32 %v1163, %v1164
    %v1166 = vand.u32 %v1165, 4294901760
    %1167 = vmatmul.mubr.f32.gmra.mrb[0].mxu0 %v1166
    %v1168 = vpop.f32.mrb[0].mxu0
    %v1169 = vadd.f32 %v1084, %v1168
    %v1170 = vpop.f32.mrb[0].mxu0
    %1171 = vdwg.mxu0
    %1172 = vmatprep.subr.mxu0 0.0
    %v1173 = vand.u32 %v1071, 4294901760
    %v1174 = vsub.f32 %v1071, %v1173
    %v1175 = vand.u32 %v1174, 4294901760
    %v1176 = vsub.f32 %v1174, %v1175
    %v1177 = vand.u32 %v1176, 4294901760
    %1178 = vmatpush1.msra.mxu0 %v1177
    %1179 = vmatprep.subr.mxu0 0.0
    %v1180 = vand.u32 %v1072, 4294901760
    %v1181 = vsub.f32 %v1072, %v1180
    %v1182 = vand.u32 %v1181, 4294901760
    %v1183 = vsub.f32 %v1181, %v1182
    %v1184 = vand.u32 %v1183, 4294901760
    %1185 = vmatpush1.msra.mxu0 %v1184
    %1186 = vmatprep.subr.mxu0 0.0
    %v1187 = vand.u32 %v1073, 4294901760
    %v1188 = vsub.f32 %v1073, %v1187
    %v1189 = vand.u32 %v1188, 4294901760
    %v1190 = vsub.f32 %v1188, %v1189
    %v1191 = vand.u32 %v1190, 4294901760
    %1192 = vmatpush1.msra.mxu0 %v1191
    %1193 = vmatprep.subr.mxu0 0.0
    %v1194 = vand.u32 %v1074, 4294901760
    %v1195 = vsub.f32 %v1074, %v1194
    %v1196 = vand.u32 %v1195, 4294901760
    %v1197 = vsub.f32 %v1195, %v1196
    %v1198 = vand.u32 %v1197, 4294901760
    %1199 = vmatpush1.msra.mxu0 %v1198
    %1200 = vmatprep.subr.mxu0 0.0
    %v1201 = vand.u32 %v1075, 4294901760
    %v1202 = vsub.f32 %v1075, %v1201
    %v1203 = vand.u32 %v1202, 4294901760
    %v1204 = vsub.f32 %v1202, %v1203
    %v1205 = vand.u32 %v1204, 4294901760
    %1206 = vmatpush1.msra.mxu0 %v1205
    %1207 = vmatprep.subr.mxu0 0.0
    %v1208 = vand.u32 %v1076, 4294901760
    %v1209 = vsub.f32 %v1076, %v1208
    %v1210 = vand.u32 %v1209, 4294901760
    %v1211 = vsub.f32 %v1209, %v1210
    %v1212 = vand.u32 %v1211, 4294901760
    %1213 = vmatpush1.msra.mxu0 %v1212
    %1214 = vmatprep.subr.mxu0 0.0
    %v1215 = vand.u32 %v1077, 4294901760
    %v1216 = vsub.f32 %v1077, %v1215
    %v1217 = vand.u32 %v1216, 4294901760
    %v1218 = vsub.f32 %v1216, %v1217
    %v1219 = vand.u32 %v1218, 4294901760
    %1220 = vmatpush1.msra.mxu0 %v1219
    %1221 = vmatprep.subr.mxu0 0.0
    %v1222 = vand.u32 %v1078, 4294901760
    %v1223 = vsub.f32 %v1078, %v1222
    %v1224 = vand.u32 %v1223, 4294901760
    %v1225 = vsub.f32 %v1223, %v1224
    %v1226 = vand.u32 %v1225, 4294901760
    %1227 = vmatpush1.msra.mxu0 %v1226
    %1228 = vmatprep.subr.mxu0 0.0
    %1229 = vmatpush1.msra.mxu0 0.0
    %1230 = vmatprep.subr.mxu0 0.0
    %1231 = vmatpush1.msra.mxu0 0.0
    %1232 = vmatprep.subr.mxu0 0.0
    %1233 = vmatpush1.msra.mxu0 0.0
    %1234 = vmatprep.subr.mxu0 0.0
    %1235 = vmatpush1.msra.mxu0 0.0
    %1236 = vmatprep.subr.mxu0 0.0
    %1237 = vmatpush1.msra.mxu0 0.0
    %1238 = vmatprep.subr.mxu0 0.0
    %1239 = vmatpush1.msra.mxu0 0.0
    %1240 = vmatprep.subr.mxu0 0.0
    %1241 = vmatpush1.msra.mxu0 0.0
    %1242 = vmatprep.subr.mxu0 0.0
    %1243 = vmatpush1.msra.mxu0 0.0
    %1244 = vmatprep.subr.mxu0 0.0
    %1245 = vmatpush1.msra.mxu0 0.0
    %1246 = vmatprep.subr.mxu0 0.0
    %1247 = vmatpush1.msra.mxu0 0.0
    %1248 = vmatprep.subr.mxu0 0.0
    %1249 = vmatpush1.msra.mxu0 0.0
    %1250 = vmatprep.subr.mxu0 0.0
    %1251 = vmatpush1.msra.mxu0 0.0
    %1252 = vmatprep.subr.mxu0 0.0
    %1253 = vmatpush1.msra.mxu0 0.0
    %1254 = vmatprep.subr.mxu0 0.0
    %1255 = vmatpush1.msra.mxu0 0.0
    %1256 = vmatprep.subr.mxu0 0.0
    %1257 = vmatpush1.msra.mxu0 0.0
    %1258 = vmatprep.subr.mxu0 0.0
    %1259 = vmatpush1.msra.mxu0 0.0
    %1260 = vmatprep.subr.mxu0 0.0
    %1261 = vmatpush1.msra.mxu0 0.0
    %1262 = vmatprep.subr.mxu0 0.0
    %1263 = vmatpush1.msra.mxu0 0.0
    %1264 = vmatprep.subr.mxu0 0.0
    %1265 = vmatpush1.msra.mxu0 0.0
    %1266 = vmatprep.subr.mxu0 0.0
    %1267 = vmatpush1.msra.mxu0 0.0
    %1268 = vmatprep.subr.mxu0 0.0
    %1269 = vmatpush1.msra.mxu0 0.0
    %1270 = vmatprep.subr.mxu0 0.0
    %1271 = vmatpush1.msra.mxu0 0.0
    %1272 = vmatprep.subr.mxu0 0.0
    %1273 = vmatpush1.msra.mxu0 0.0
    %1274 = vmatprep.subr.mxu0 0.0
    %1275 = vmatpush1.msra.mxu0 0.0
    %1276 = vmatprep.mubr.f32.mxu0 0.0
    %v1277 = vand.u32 %v1087, 4294901760
    %1278 = vmatmul.mubr.f32.gmra.mrb[0].mxu0 %v1277
    %v1279 = vpop.f32.mrb[0].mxu0
    %v1280 = vadd.f32 %v1169, %v1279
    %v1281 = vpop.f32.mrb[0].mxu0
    %1282 = vdwg.mxu0
    %1283 = vmatprep.subr.mxu0 0.0
    %v1284 = vand.u32 %v1071, 4294901760
    %v1285 = vsub.f32 %v1071, %v1284
    %1286 = vmatpush1.msra.mxu0 %v1285
    %1287 = vmatprep.subr.mxu0 0.0
    %v1288 = vand.u32 %v1072, 4294901760
    %v1289 = vsub.f32 %v1072, %v1288
    %1290 = vmatpush1.msra.mxu0 %v1289
    %1291 = vmatprep.subr.mxu0 0.0
    %v1292 = vand.u32 %v1073, 4294901760
    %v1293 = vsub.f32 %v1073, %v1292
    %1294 = vmatpush1.msra.mxu0 %v1293
    %1295 = vmatprep.subr.mxu0 0.0
    %v1296 = vand.u32 %v1074, 4294901760
    %v1297 = vsub.f32 %v1074, %v1296
    %1298 = vmatpush1.msra.mxu0 %v1297
    %1299 = vmatprep.subr.mxu0 0.0
    %v1300 = vand.u32 %v1075, 4294901760
    %v1301 = vsub.f32 %v1075, %v1300
    %1302 = vmatpush1.msra.mxu0 %v1301
    %1303 = vmatprep.subr.mxu0 0.0
    %v1304 = vand.u32 %v1076, 4294901760
    %v1305 = vsub.f32 %v1076, %v1304
    %1306 = vmatpush1.msra.mxu0 %v1305
    %1307 = vmatprep.subr.mxu0 0.0
    %v1308 = vand.u32 %v1077, 4294901760
    %v1309 = vsub.f32 %v1077, %v1308
    %1310 = vmatpush1.msra.mxu0 %v1309
    %1311 = vmatprep.subr.mxu0 0.0
    %v1312 = vand.u32 %v1078, 4294901760
    %v1313 = vsub.f32 %v1078, %v1312
    %1314 = vmatpush1.msra.mxu0 %v1313
    %1315 = vmatprep.subr.mxu0 0.0
    %1316 = vmatpush1.msra.mxu0 0.0
    %1317 = vmatprep.subr.mxu0 0.0
    %1318 = vmatpush1.msra.mxu0 0.0
    %1319 = vmatprep.subr.mxu0 0.0
    %1320 = vmatpush1.msra.mxu0 0.0
    %1321 = vmatprep.subr.mxu0 0.0
    %1322 = vmatpush1.msra.mxu0 0.0
    %1323 = vmatprep.subr.mxu0 0.0
    %1324 = vmatpush1.msra.mxu0 0.0
    %1325 = vmatprep.subr.mxu0 0.0
    %1326 = vmatpush1.msra.mxu0 0.0
    %1327 = vmatprep.subr.mxu0 0.0
    %1328 = vmatpush1.msra.mxu0 0.0
    %1329 = vmatprep.subr.mxu0 0.0
    %1330 = vmatpush1.msra.mxu0 0.0
    %1331 = vmatprep.subr.mxu0 0.0
    %1332 = vmatpush1.msra.mxu0 0.0
    %1333 = vmatprep.subr.mxu0 0.0
    %1334 = vmatpush1.msra.mxu0 0.0
    %1335 = vmatprep.subr.mxu0 0.0
    %1336 = vmatpush1.msra.mxu0 0.0
    %1337 = vmatprep.subr.mxu0 0.0
    %1338 = vmatpush1.msra.mxu0 0.0
    %1339 = vmatprep.subr.mxu0 0.0
    %1340 = vmatpush1.msra.mxu0 0.0
    %1341 = vmatprep.subr.mxu0 0.0
    %1342 = vmatpush1.msra.mxu0 0.0
    %1343 = vmatprep.subr.mxu0 0.0
    %1344 = vmatpush1.msra.mxu0 0.0
    %1345 = vmatprep.subr.mxu0 0.0
    %1346 = vmatpush1.msra.mxu0 0.0
    %1347 = vmatprep.subr.mxu0 0.0
    %1348 = vmatpush1.msra.mxu0 0.0
    %1349 = vmatprep.subr.mxu0 0.0
    %1350 = vmatpush1.msra.mxu0 0.0
    %1351 = vmatprep.subr.mxu0 0.0
    %1352 = vmatpush1.msra.mxu0 0.0
    %1353 = vmatprep.subr.mxu0 0.0
    %1354 = vmatpush1.msra.mxu0 0.0
    %1355 = vmatprep.subr.mxu0 0.0
    %1356 = vmatpush1.msra.mxu0 0.0
    %1357 = vmatprep.subr.mxu0 0.0
    %1358 = vmatpush1.msra.mxu0 0.0
    %1359 = vmatprep.subr.mxu0 0.0
    %1360 = vmatpush1.msra.mxu0 0.0
    %1361 = vmatprep.subr.mxu0 0.0
    %1362 = vmatpush1.msra.mxu0 0.0
    %1363 = vmatprep.mubr.f32.mxu0 0.0
    %v1364 = vand.u32 %v1087, 4294901760
    %v1365 = vsub.f32 %v1087, %v1364
    %1366 = vmatmul.mubr.f32.gmra.mrb[0].mxu0 %v1365
    %v1367 = vpop.f32.mrb[0].mxu0
    %v1368 = vadd.f32 %v1280, %v1367
    %v1369 = vpop.f32.mrb[0].mxu0
    %1370 = vdwg.mxu0
    %1371 = vmatprep.subr.mxu0 0.0
    %v1372 = vand.u32 %v1071, 4294901760
    %1373 = vmatpush1.msra.mxu0 %v1372
    %1374 = vmatprep.subr.mxu0 0.0
    %v1375 = vand.u32 %v1072, 4294901760
    %1376 = vmatpush1.msra.mxu0 %v1375
    %1377 = vmatprep.subr.mxu0 0.0
    %v1378 = vand.u32 %v1073, 4294901760
    %1379 = vmatpush1.msra.mxu0 %v1378
    %1380 = vmatprep.subr.mxu0 0.0
    %v1381 = vand.u32 %v1074, 4294901760
    %1382 = vmatpush1.msra.mxu0 %v1381
    %1383 = vmatprep.subr.mxu0 0.0
    %v1384 = vand.u32 %v1075, 4294901760
    %1385 = vmatpush1.msra.mxu0 %v1384
    %1386 = vmatprep.subr.mxu0 0.0
    %v1387 = vand.u32 %v1076, 4294901760
    %1388 = vmatpush1.msra.mxu0 %v1387
    %1389 = vmatprep.subr.mxu0 0.0
    %v1390 = vand.u32 %v1077, 4294901760
    %1391 = vmatpush1.msra.mxu0 %v1390
    %1392 = vmatprep.subr.mxu0 0.0
    %v1393 = vand.u32 %v1078, 4294901760
    %1394 = vmatpush1.msra.mxu0 %v1393
    %1395 = vmatprep.subr.mxu0 0.0
    %1396 = vmatpush1.msra.mxu0 0.0
    %1397 = vmatprep.subr.mxu0 0.0
    %1398 = vmatpush1.msra.mxu0 0.0
    %1399 = vmatprep.subr.mxu0 0.0
    %1400 = vmatpush1.msra.mxu0 0.0
    %1401 = vmatprep.subr.mxu0 0.0
    %1402 = vmatpush1.msra.mxu0 0.0
    %1403 = vmatprep.subr.mxu0 0.0
    %1404 = vmatpush1.msra.mxu0 0.0
    %1405 = vmatprep.subr.mxu0 0.0
    %1406 = vmatpush1.msra.mxu0 0.0
    %1407 = vmatprep.subr.mxu0 0.0
    %1408 = vmatpush1.msra.mxu0 0.0
    %1409 = vmatprep.subr.mxu0 0.0
    %1410 = vmatpush1.msra.mxu0 0.0
    %1411 = vmatprep.subr.mxu0 0.0
    %1412 = vmatpush1.msra.mxu0 0.0
    %1413 = vmatprep.subr.mxu0 0.0
    %1414 = vmatpush1.msra.mxu0 0.0
    %1415 = vmatprep.subr.mxu0 0.0
    %1416 = vmatpush1.msra.mxu0 0.0
    %1417 = vmatprep.subr.mxu0 0.0
    %1418 = vmatpush1.msra.mxu0 0.0
    %1419 = vmatprep.subr.mxu0 0.0
    %1420 = vmatpush1.msra.mxu0 0.0
    %1421 = vmatprep.subr.mxu0 0.0
    %1422 = vmatpush1.msra.mxu0 0.0
    %1423 = vmatprep.subr.mxu0 0.0
    %1424 = vmatpush1.msra.mxu0 0.0
    %1425 = vmatprep.subr.mxu0 0.0
    %1426 = vmatpush1.msra.mxu0 0.0
    %1427 = vmatprep.subr.mxu0 0.0
    %1428 = vmatpush1.msra.mxu0 0.0
    %1429 = vmatprep.subr.mxu0 0.0
    %1430 = vmatpush1.msra.mxu0 0.0
    %1431 = vmatprep.subr.mxu0 0.0
    %1432 = vmatpush1.msra.mxu0 0.0
    %1433 = vmatprep.subr.mxu0 0.0
    %1434 = vmatpush1.msra.mxu0 0.0
    %1435 = vmatprep.subr.mxu0 0.0
    %1436 = vmatpush1.msra.mxu0 0.0
    %1437 = vmatprep.subr.mxu0 0.0
    %1438 = vmatpush1.msra.mxu0 0.0
    %1439 = vmatprep.subr.mxu0 0.0
    %1440 = vmatpush1.msra.mxu0 0.0
    %1441 = vmatprep.subr.mxu0 0.0
    %1442 = vmatpush1.msra.mxu0 0.0
    %1443 = vmatprep.mubr.f32.mxu0 0.0
    %v1444 = vand.u32 %v1087, 4294901760
    %v1445 = vsub.f32 %v1087, %v1444
    %v1446 = vand.u32 %v1445, 4294901760
    %1447 = vmatmul.mubr.f32.gmra.mrb[0].mxu0 %v1446
    %v1448 = vpop.f32.mrb[0].mxu0
    %v1449 = vadd.f32 %v1368, %v1448
    %v1450 = vpop.f32.mrb[0].mxu0
    %1451 = vdwg.mxu0
    %1452 = vmatprep.subr.mxu0 0.0
    %v1453 = vand.u32 %v1071, 4294901760
    %v1454 = vsub.f32 %v1071, %v1453
    %v1455 = vand.u32 %v1454, 4294901760
    %1456 = vmatpush1.msra.mxu0 %v1455
    %1457 = vmatprep.subr.mxu0 0.0
    %v1458 = vand.u32 %v1072, 4294901760
    %v1459 = vsub.f32 %v1072, %v1458
    %v1460 = vand.u32 %v1459, 4294901760
    %1461 = vmatpush1.msra.mxu0 %v1460
    %1462 = vmatprep.subr.mxu0 0.0
    %v1463 = vand.u32 %v1073, 4294901760
    %v1464 = vsub.f32 %v1073, %v1463
    %v1465 = vand.u32 %v1464, 4294901760
    %1466 = vmatpush1.msra.mxu0 %v1465
    %1467 = vmatprep.subr.mxu0 0.0
    %v1468 = vand.u32 %v1074, 4294901760
    %v1469 = vsub.f32 %v1074, %v1468
    %v1470 = vand.u32 %v1469, 4294901760
    %1471 = vmatpush1.msra.mxu0 %v1470
    %1472 = vmatprep.subr.mxu0 0.0
    %v1473 = vand.u32 %v1075, 4294901760
    %v1474 = vsub.f32 %v1075, %v1473
    %v1475 = vand.u32 %v1474, 4294901760
    %1476 = vmatpush1.msra.mxu0 %v1475
    %1477 = vmatprep.subr.mxu0 0.0
    %v1478 = vand.u32 %v1076, 4294901760
    %v1479 = vsub.f32 %v1076, %v1478
    %v1480 = vand.u32 %v1479, 4294901760
    %1481 = vmatpush1.msra.mxu0 %v1480
    %1482 = vmatprep.subr.mxu0 0.0
    %v1483 = vand.u32 %v1077, 4294901760
    %v1484 = vsub.f32 %v1077, %v1483
    %v1485 = vand.u32 %v1484, 4294901760
    %1486 = vmatpush1.msra.mxu0 %v1485
    %1487 = vmatprep.subr.mxu0 0.0
    %v1488 = vand.u32 %v1078, 4294901760
    %v1489 = vsub.f32 %v1078, %v1488
    %v1490 = vand.u32 %v1489, 4294901760
    %1491 = vmatpush1.msra.mxu0 %v1490
    %1492 = vmatprep.subr.mxu0 0.0
    %1493 = vmatpush1.msra.mxu0 0.0
    %1494 = vmatprep.subr.mxu0 0.0
    %1495 = vmatpush1.msra.mxu0 0.0
    %1496 = vmatprep.subr.mxu0 0.0
    %1497 = vmatpush1.msra.mxu0 0.0
    %1498 = vmatprep.subr.mxu0 0.0
    %1499 = vmatpush1.msra.mxu0 0.0
    %1500 = vmatprep.subr.mxu0 0.0
    %1501 = vmatpush1.msra.mxu0 0.0
    %1502 = vmatprep.subr.mxu0 0.0
    %1503 = vmatpush1.msra.mxu0 0.0
    %1504 = vmatprep.subr.mxu0 0.0
    %1505 = vmatpush1.msra.mxu0 0.0
    %1506 = vmatprep.subr.mxu0 0.0
    %1507 = vmatpush1.msra.mxu0 0.0
    %1508 = vmatprep.subr.mxu0 0.0
    %1509 = vmatpush1.msra.mxu0 0.0
    %1510 = vmatprep.subr.mxu0 0.0
    %1511 = vmatpush1.msra.mxu0 0.0
    %1512 = vmatprep.subr.mxu0 0.0
    %1513 = vmatpush1.msra.mxu0 0.0
    %1514 = vmatprep.subr.mxu0 0.0
    %1515 = vmatpush1.msra.mxu0 0.0
    %1516 = vmatprep.subr.mxu0 0.0
    %1517 = vmatpush1.msra.mxu0 0.0
    %1518 = vmatprep.subr.mxu0 0.0
    %1519 = vmatpush1.msra.mxu0 0.0
    %1520 = vmatprep.subr.mxu0 0.0
    %1521 = vmatpush1.msra.mxu0 0.0
    %1522 = vmatprep.subr.mxu0 0.0
    %1523 = vmatpush1.msra.mxu0 0.0
    %1524 = vmatprep.subr.mxu0 0.0
    %1525 = vmatpush1.msra.mxu0 0.0
    %1526 = vmatprep.subr.mxu0 0.0
    %1527 = vmatpush1.msra.mxu0 0.0
    %1528 = vmatprep.subr.mxu0 0.0
    %1529 = vmatpush1.msra.mxu0 0.0
    %1530 = vmatprep.subr.mxu0 0.0
    %1531 = vmatpush1.msra.mxu0 0.0
    %1532 = vmatprep.subr.mxu0 0.0
    %1533 = vmatpush1.msra.mxu0 0.0
    %1534 = vmatprep.subr.mxu0 0.0
    %1535 = vmatpush1.msra.mxu0 0.0
    %1536 = vmatprep.subr.mxu0 0.0
    %1537 = vmatpush1.msra.mxu0 0.0
    %1538 = vmatprep.subr.mxu0 0.0
    %1539 = vmatpush1.msra.mxu0 0.0
    %1540 = vmatprep.mubr.f32.mxu0 0.0
    %v1541 = vand.u32 %v1087, 4294901760
    %1542 = vmatmul.mubr.f32.gmra.mrb[0].mxu0 %v1541
    %v1543 = vpop.f32.mrb[0].mxu0
    %v1544 = vadd.f32 %v1449, %v1543
    %v1545 = vpop.f32.mrb[0].mxu0
    %1546 = vdwg.mxu0
    %1547 = vmatprep.subr.mxu0 0.0
    %v1548 = vand.u32 %v1071, 4294901760
    %1549 = vmatpush1.msra.mxu0 %v1548
    %1550 = vmatprep.subr.mxu0 0.0
    %v1551 = vand.u32 %v1072, 4294901760
    %1552 = vmatpush1.msra.mxu0 %v1551
    %1553 = vmatprep.subr.mxu0 0.0
    %v1554 = vand.u32 %v1073, 4294901760
    %1555 = vmatpush1.msra.mxu0 %v1554
    %1556 = vmatprep.subr.mxu0 0.0
    %v1557 = vand.u32 %v1074, 4294901760
    %1558 = vmatpush1.msra.mxu0 %v1557
    %1559 = vmatprep.subr.mxu0 0.0
    %v1560 = vand.u32 %v1075, 4294901760
    %1561 = vmatpush1.msra.mxu0 %v1560
    %1562 = vmatprep.subr.mxu0 0.0
    %v1563 = vand.u32 %v1076, 4294901760
    %1564 = vmatpush1.msra.mxu0 %v1563
    %1565 = vmatprep.subr.mxu0 0.0
    %v1566 = vand.u32 %v1077, 4294901760
    %1567 = vmatpush1.msra.mxu0 %v1566
    %1568 = vmatprep.subr.mxu0 0.0
    %v1569 = vand.u32 %v1078, 4294901760
    %1570 = vmatpush1.msra.mxu0 %v1569
    %1571 = vmatprep.subr.mxu0 0.0
    %1572 = vmatpush1.msra.mxu0 0.0
    %1573 = vmatprep.subr.mxu0 0.0
    %1574 = vmatpush1.msra.mxu0 0.0
    %1575 = vmatprep.subr.mxu0 0.0
    %1576 = vmatpush1.msra.mxu0 0.0
    %1577 = vmatprep.subr.mxu0 0.0
    %1578 = vmatpush1.msra.mxu0 0.0
    %1579 = vmatprep.subr.mxu0 0.0
    %1580 = vmatpush1.msra.mxu0 0.0
    %1581 = vmatprep.subr.mxu0 0.0
    %1582 = vmatpush1.msra.mxu0 0.0
    %1583 = vmatprep.subr.mxu0 0.0
    %1584 = vmatpush1.msra.mxu0 0.0
    %1585 = vmatprep.subr.mxu0 0.0
    %1586 = vmatpush1.msra.mxu0 0.0
    %1587 = vmatprep.subr.mxu0 0.0
    %1588 = vmatpush1.msra.mxu0 0.0
    %1589 = vmatprep.subr.mxu0 0.0
    %1590 = vmatpush1.msra.mxu0 0.0
    %1591 = vmatprep.subr.mxu0 0.0
    %1592 = vmatpush1.msra.mxu0 0.0
    %1593 = vmatprep.subr.mxu0 0.0
    %1594 = vmatpush1.msra.mxu0 0.0
    %1595 = vmatprep.subr.mxu0 0.0
    %1596 = vmatpush1.msra.mxu0 0.0
    %1597 = vmatprep.subr.mxu0 0.0
    %1598 = vmatpush1.msra.mxu0 0.0
    %1599 = vmatprep.subr.mxu0 0.0
    %1600 = vmatpush1.msra.mxu0 0.0
    %1601 = vmatprep.subr.mxu0 0.0
    %1602 = vmatpush1.msra.mxu0 0.0
    %1603 = vmatprep.subr.mxu0 0.0
    %1604 = vmatpush1.msra.mxu0 0.0
    %1605 = vmatprep.subr.mxu0 0.0
    %1606 = vmatpush1.msra.mxu0 0.0
    %1607 = vmatprep.subr.mxu0 0.0
    %1608 = vmatpush1.msra.mxu0 0.0
    %1609 = vmatprep.subr.mxu0 0.0
    %1610 = vmatpush1.msra.mxu0 0.0
    %1611 = vmatprep.subr.mxu0 0.0
    %1612 = vmatpush1.msra.mxu0 0.0
    %1613 = vmatprep.subr.mxu0 0.0
    %1614 = vmatpush1.msra.mxu0 0.0
    %1615 = vmatprep.subr.mxu0 0.0
    %1616 = vmatpush1.msra.mxu0 0.0
    %1617 = vmatprep.subr.mxu0 0.0
    %1618 = vmatpush1.msra.mxu0 0.0
    %1619 = vmatprep.mubr.f32.mxu0 0.0
    %v1620 = vand.u32 %v1087, 4294901760
    %1621 = vmatmul.mubr.f32.gmra.mrb[0].mxu0 %v1620
    %v1622 = vpop.f32.mrb[0].mxu0
    %v1623 = vadd.f32 %v1544, %v1622
    %v1624 = vpop.f32.mrb[0].mxu0
    %1625 = vdwg.mxu0
    %v1626 = vtanh.pop %v1623
    %vm1627 = vcmask 31744
    %1628 = vst.msk [vmem:[%s7] sm:$0xff] %vm1627, %v1626
    // Predicated region
    $region34: #{tpu_custom_call.1} parent=1 // pred_check
      _
    $region35: #{tpu_custom_call.1} parent=1 // pred_check_branch
      %1630 = sbr.rel (0) target = $region37
    $region36: #{tpu_custom_call.1} parent=1 // pred_region
      _
    $region37: #{tpu_custom_call.1} parent=1 // pred_fallthru
      _
    // Predicated region
    $region38: #{tpu_custom_call.1} parent=1 // pred_check
      _
    $region39: #{tpu_custom_call.1} parent=1 // pred_check_branch
      %1632 = sbr.rel (0) target = $region41
    $region40: #{tpu_custom_call.1} parent=1 // pred_region
      _
    $region41: #{tpu_custom_call.1} parent=1 // pred_fallthru
      _
    %1633 = vsyncpa [#allocation3], 1

</llo_original>
